<compile_context>
chip_gen: v7x
topology: tpu7x:2x2x1
jax: 0.10.0
libtpu: 0.0.40
codegen_flags: <defaults>
</compile_context>

<pallas_src>
import functools

import numpy as np
import jax
import jax.numpy as jnp
from jax import lax
from jax.experimental import pallas as pl
from jax.experimental.pallas import tpu as pltpu


def _cutpaste_kernel(ip_ref, fp_ref, in_ref, out_ref, *, H, W, PH, order):
    """One grid step = one batch image: clone + crop + ColorJitter + paste.

    ip_ref : (6,)  int32 SMEM  [ci, cj, pi, pj, ph, pw]   (runtime scalars)
    fp_ref : (4,)  f32   SMEM  [brightness, contrast, saturation, hue]
    in_ref / out_ref : (C, H, W) VMEM blocks (batch dim squeezed by BlockSpec)
    PH     : static patch-height bucket (power of two, >= ph, <= H)
    order  : static ColorJitter op order (tuple of 4 ints)
    """
    # ---- runtime parameters (SMEM scalars; changing them never recompiles) --
    ci, cj = ip_ref[0], ip_ref[1]          # source-crop top-left
    pi, pj = ip_ref[2], ip_ref[3]          # paste top-left
    ph, pw = ip_ref[4], ip_ref[5]          # true patch extents (<= PH, <= W)
    bf, cf, sf, hf = fp_ref[0], fp_ref[1], fp_ref[2], fp_ref[3]

    # ---- 1. clone: copy this image's block unchanged -------------------------
    out_ref[...] = in_ref[...]

    # ---- 2. read the source row band (full width, static height PH) ----------
    src_start = jnp.minimum(ci, H - PH)    # clamp so the static-size read is in bounds
    dr0 = ci - src_start                   # patch row 0 inside the source band
    dst_start = jnp.minimum(pi, H - PH)
    dr1 = pi - dst_start                   # patch row 0 inside the destination band

    r = in_ref[0, pl.ds(src_start, PH), :].astype(jnp.float32)   # (PH, W)
    g = in_ref[1, pl.ds(src_start, PH), :].astype(jnp.float32)
    b = in_ref[2, pl.ds(src_start, PH), :].astype(jnp.float32)

    row_ids = lax.broadcasted_iota(jnp.int32, (PH, W), 0)
    col_ids = lax.broadcasted_iota(jnp.int32, (PH, W), 1)
    src_mask = ((row_ids >= dr0) & (row_ids < dr0 + ph) &
                (col_ids >= cj) & (col_ids < cj + pw))
    npix = (ph * pw).astype(jnp.float32)

    # ---- 3. ColorJitter (torchvision semantics) on the full-width band -------
    def gray_of(r_, g_, b_):
        return 0.2989 * r_ + 0.587 * g_ + 0.114 * b_

    def blend(x, y, ratio):                     # torchvision _blend, bound = 1.0
        return jnp.clip(ratio * x + (1.0 - ratio) * y, 0.0, 1.0)

    def adj_brightness(r_, g_, b_):
        return blend(r_, 0.0, bf), blend(g_, 0.0, bf), blend(b_, 0.0, bf)

    def adj_contrast(r_, g_, b_):
        gray = gray_of(r_, g_, b_)
        masked = jnp.where(src_mask, gray, 0.0)          # mean over the true patch only
        mean = jnp.sum(jnp.sum(masked, axis=1, keepdims=True),
                       axis=0, keepdims=True) / npix
        return blend(r_, mean, cf), blend(g_, mean, cf), blend(b_, mean, cf)

    def adj_saturation(r_, g_, b_):
        gray = gray_of(r_, g_, b_)
        return blend(r_, gray, sf), blend(g_, gray, sf), blend(b_, gray, sf)

    def adj_hue(r_, g_, b_):
        # torchvision _rgb2hsv -> hue shift -> _hsv2rgb, exact division.
        maxc = jnp.maximum(jnp.maximum(r_, g_), b_)
        minc = jnp.minimum(jnp.minimum(r_, g_), b_)
        eqc = maxc == minc
        cr = maxc - minc
        ones = jnp.ones_like(maxc)
        s = cr / jnp.where(eqc, ones, maxc)
        crd = jnp.where(eqc, ones, cr)
        rc = (maxc - r_) / crd
        gc = (maxc - g_) / crd
        bc = (maxc - b_) / crd
        hr = jnp.where(maxc == r_, bc - gc, 0.0)
        hg = jnp.where((maxc == g_) & (maxc != r_), 2.0 + rc - bc, 0.0)
        hb = jnp.where((maxc != g_) & (maxc != r_), 4.0 + gc - rc, 0.0)

        def frac(x):                            # floored mod-1 (no lax.rem needed)
            return x - jnp.floor(x)

        h = frac((hr + hg + hb) / 6.0 + 1.0)
        h = frac(h + hf)

        v = maxc
        i6 = jnp.floor(h * 6.0)                 # in {0, ..., 5}
        f = h * 6.0 - i6
        p_ = jnp.clip(v * (1.0 - s), 0.0, 1.0)
        q_ = jnp.clip(v * (1.0 - s * f), 0.0, 1.0)
        t_ = jnp.clip(v * (1.0 - s * (1.0 - f)), 0.0, 1.0)

        # sector masks computed once, reused for all three channels (perf feedback)
        m0, m1, m2 = i6 == 0.0, i6 == 1.0, i6 == 2.0
        m3, m4 = i6 == 3.0, i6 == 4.0

        def pick(c0, c1, c2, c3, c4, c5):
            return jnp.where(m0, c0, jnp.where(m1, c1, jnp.where(m2, c2,
                   jnp.where(m3, c3, jnp.where(m4, c4, c5)))))

        return (pick(v, q_, p_, p_, t_, v),
                pick(t_, v, v, q_, p_, p_),
                pick(p_, p_, t_, v, v, q_))

    ops = (adj_brightness, adj_contrast, adj_saturation, adj_hue)
    for k in order:                     # host-random op order, static unroll
        r, g, b = ops[k](r, g, b)

    # ---- 4. destination alignment + single masked merge per channel ----------
    # The jittered band is source-aligned; the paste wants
    #   out[pi + m, pj + q] = band[dr0 + m, cj + q].
    # Shift rows by (dr1 - dr0) and columns by (pj - cj) with tiny one-hot
    # permutation matmuls (robust lowering; no dynamic lane shifts needed).
    row_shift = dr1 - dr0
    col_shift = pj - cj
    rd = lax.broadcasted_iota(jnp.int32, (PH, PH), 0)     # dest band row
    rs = lax.broadcasted_iota(jnp.int32, (PH, PH), 1)     # source band row
    perm_r = jnp.where(rd == rs + row_shift, 1.0, 0.0)    # (PH, PH) f32
    cs = lax.broadcasted_iota(jnp.int32, (W, W), 0)       # source column
    cd = lax.broadcasted_iota(jnp.int32, (W, W), 1)       # dest column
    perm_c = jnp.where(cd == cs + col_shift, 1.0, 0.0)    # (W, W) f32

    dst_mask = ((row_ids >= dr1) & (row_ids < dr1 + ph) &
                (col_ids >= pj) & (col_ids < pj + pw))

    for c, chan in enumerate((r, g, b)):
        aligned = jnp.dot(
            jnp.dot(perm_r, chan, preferred_element_type=jnp.float32),
            perm_c, preferred_element_type=jnp.float32)
        keep = in_ref[c, pl.ds(dst_start, PH), :].astype(jnp.float32)
        merged = jnp.where(dst_mask, aligned, keep)
        # full-width, lane-dense store of only the touched rows
        out_ref[c, pl.ds(dst_start, PH), :] = merged.astype(out_ref.dtype)


def _next_pow2(x: int) -> int:
    return 1 << max(0, int(x) - 1).bit_length()


@functools.lru_cache(maxsize=None)
def _build_cutpaste_call(N, C, H, W, dtype_name, PH, order):
    """Compile-once builder: one variant per (shape, dtype, PH bucket, op order)."""
    dtype = jnp.dtype(dtype_name)
    kernel = functools.partial(_cutpaste_kernel, H=H, W=W, PH=PH, order=order)

    # VMEM budget: double-buffered (C,H,W) in + out blocks, f32 band temporaries
    # and the permutation matrices; sized with 2x headroom, capped below v7x's
    # 64 MiB physical VMEM.
    vmem_est = (4 * C * H * W * dtype.itemsize
                + 32 * PH * W * 4
                + 4 * W * W * 4
                + 4 * PH * PH * 4)
    vmem_limit = int(min(60 * 2**20, max(32 * 2**20, 2 * vmem_est)))

    grid_spec = pltpu.PrefetchScalarGridSpec(
        num_scalar_prefetch=0,
        grid=(N,),
        in_specs=[
            pl.BlockSpec(memory_space=pltpu.MemorySpace.SMEM),   # iparams (6,) int32
            pl.BlockSpec(memory_space=pltpu.MemorySpace.SMEM),   # fparams (4,) f32
            pl.BlockSpec((None, C, H, W), lambda n: (n, 0, 0, 0)),
        ],
        out_specs=pl.BlockSpec((None, C, H, W), lambda n: (n, 0, 0, 0)),
    )

    call = pl.pallas_call(
        kernel,
        out_shape=jax.ShapeDtypeStruct((N, C, H, W), dtype),
        grid_spec=grid_spec,
        compiler_params=pltpu.CompilerParams(
            dimension_semantics=("parallel",),   # batch sharded across TCs on v7x
            vmem_limit_bytes=vmem_limit,
        ),
    )
    return jax.jit(call)


def cutpaste(img, *, color_jitter=0.1, seed=0):
    """JAX/Pallas equivalent of CutPaste.forward (NCHW float image in [0, 1])."""
    N, C, H, W = img.shape
    assert C == 3, "ColorJitter hue/saturation requires RGB (3 channels)"

    rng = np.random.default_rng(seed)

    # --- to_patch_size ---
    area_range = (0.02, 0.15)
    aspect_ranges = ((0.3, 1.0), (1.0, 3.3))
    patch_area = rng.uniform(*area_range) * (H * W)
    patch_aspect = float(rng.choice([rng.uniform(*aspect_ranges[0]),
                                     rng.uniform(*aspect_ranges[1])]))
    ph = int(np.sqrt(patch_area / patch_aspect))
    pw = int(np.sqrt(patch_area * patch_aspect))
    ph = max(1, min(ph, H - 1))
    pw = max(1, min(pw, W - 1))

    # --- to_patch_position (source crop) ---
    ci = int(rng.integers(0, H - ph))
    cj = int(rng.integers(0, W - pw))

    # --- ColorJitter params (factors + random op order, as torchvision) ---
    lo = max(0.0, 1.0 - color_jitter)
    bf = float(rng.uniform(lo, 1.0 + color_jitter))
    cf = float(rng.uniform(lo, 1.0 + color_jitter))
    sf = float(rng.uniform(lo, 1.0 + color_jitter))
    hf = float(rng.uniform(-color_jitter, color_jitter))
    order = tuple(int(k) for k in rng.permutation(4))

    # --- to_patch_position (paste position) ---
    pi = int(rng.integers(0, H - ph))
    pj = int(rng.integers(0, W - pw))

    # Static patch-height bucket (power of two, <= H) -> a handful of compiled
    # variants; offsets/extents/jitter factors are runtime SMEM scalars.
    PH = min(H, max(8, _next_pow2(ph)))

    fn = _build_cutpaste_call(N, C, H, W, jnp.dtype(img.dtype).name, PH, order)
    iparams = jnp.array([ci, cj, pi, pj, ph, pw], dtype=jnp.int32)
    fparams = jnp.array([bf, cf, sf, hf], dtype=jnp.float32)
    return fn(iparams, fparams, img)


if __name__ == "__main__":
    key = jax.random.PRNGKey(0)
    img = jax.random.uniform(key, (2, 3, 64, 64), dtype=jnp.float32)  # NCHW, [0,1]
    out = cutpaste(img, color_jitter=0.1, seed=0)
    out = jax.block_until_ready(out)
    assert out.shape == img.shape and out.dtype == img.dtype
    assert bool(jnp.all(jnp.isfinite(out)))
    # Everything outside the pasted patch is a bit-exact copy; the patch covers
    # at most 15% of the image area.
    changed_frac = float(jnp.mean((out != img).astype(jnp.float32)))
    assert changed_frac <= 0.16
    print("KERNEL_OK")
</pallas_src>

<mosaic_0001>
module attributes {stable_mosaic.version = 11 : i64} {
  func.func @_cutpaste_kernel(%arg0: i32, %arg1: memref<6xi32, #tpu.memory_space<smem>>, %arg2: memref<4xf32, #tpu.memory_space<smem>>, %arg3: memref<1x3x64x64xf32, #tpu.memory_space<vmem>>, %arg4: memref<1x3x64x64xf32, #tpu.memory_space<vmem>>) attributes {dimension_semantics = [#tpu.dimension_semantics<parallel>], iteration_bounds = array<i64: 2>, scalar_prefetch = 0 : i64, scratch_operands = 0 : i64, tpu.core_type = #tpu.core_type<tc>, window_params = [{transform_indices = @transform_0, window_bounds = array<i64: 6>}, {transform_indices = @transform_1, window_bounds = array<i64: 4>}, {transform_indices = @transform_2, window_bounds = array<i64: 1, 3, 64, 64>}, {transform_indices = @transform_3, window_bounds = array<i64: 1, 3, 64, 64>}]} {
    %c0 = arith.constant 0 : index
    %0 = memref.load %arg1[%c0] : memref<6xi32, #tpu.memory_space<smem>>
    %c1 = arith.constant 1 : index
    %1 = memref.load %arg1[%c1] : memref<6xi32, #tpu.memory_space<smem>>
    %c2 = arith.constant 2 : index
    %2 = memref.load %arg1[%c2] : memref<6xi32, #tpu.memory_space<smem>>
    %c3 = arith.constant 3 : index
    %3 = memref.load %arg1[%c3] : memref<6xi32, #tpu.memory_space<smem>>
    %c4 = arith.constant 4 : index
    %4 = memref.load %arg1[%c4] : memref<6xi32, #tpu.memory_space<smem>>
    %c5 = arith.constant 5 : index
    %5 = memref.load %arg1[%c5] : memref<6xi32, #tpu.memory_space<smem>>
    %c0_0 = arith.constant 0 : index
    %6 = memref.load %arg2[%c0_0] : memref<4xf32, #tpu.memory_space<smem>>
    %c1_1 = arith.constant 1 : index
    %7 = memref.load %arg2[%c1_1] : memref<4xf32, #tpu.memory_space<smem>>
    %c2_2 = arith.constant 2 : index
    %8 = memref.load %arg2[%c2_2] : memref<4xf32, #tpu.memory_space<smem>>
    %c3_3 = arith.constant 3 : index
    %9 = memref.load %arg2[%c3_3] : memref<4xf32, #tpu.memory_space<smem>>
    %c0_4 = arith.constant 0 : index
    %c0_5 = arith.constant 0 : index
    %c0_6 = arith.constant 0 : index
    %c0_7 = arith.constant 0 : index
    %10 = vector.load %arg3[%c0_4, %c0_5, %c0_6, %c0_7] : memref<1x3x64x64xf32, #tpu.memory_space<vmem>>, vector<1x3x64x64xf32>
    %11 = vector.shape_cast %10 : vector<1x3x64x64xf32> to vector<3x64x64xf32>
    %c0_8 = arith.constant 0 : index
    %c0_9 = arith.constant 0 : index
    %c0_10 = arith.constant 0 : index
    %c0_11 = arith.constant 0 : index
    %12 = vector.load %arg4[%c0_8, %c0_9, %c0_10, %c0_11] : memref<1x3x64x64xf32, #tpu.memory_space<vmem>>, vector<1x3x64x64xf32>
    %13 = vector.shape_cast %12 : vector<1x3x64x64xf32> to vector<3x64x64xf32>
    %14 = vector.shape_cast %11 : vector<3x64x64xf32> to vector<1x3x64x64xf32>
    tpu.vector_store %arg4[%c0_8, %c0_9, %c0_10, %c0_11], %14 {strides = array<i32>} : memref<1x3x64x64xf32, #tpu.memory_space<vmem>>, vector<1x3x64x64xf32>,
    %c32_i32 = arith.constant 32 : i32
    %15 = arith.minsi %0, %c32_i32 : i32
    %16 = arith.subi %0, %15 : i32
    %c32_i32_12 = arith.constant 32 : i32
    %17 = arith.minsi %2, %c32_i32_12 : i32
    %18 = arith.subi %2, %17 : i32
    %c0_13 = arith.constant 0 : index
    %c0_14 = arith.constant 0 : index
    %19 = arith.index_cast %15 : i32 to index
    %c0_15 = arith.constant 0 : index
    %20 = vector.load %arg3[%c0_13, %c0_14, %19, %c0_15] : memref<1x3x64x64xf32, #tpu.memory_space<vmem>>, vector<1x1x32x64xf32>
    %21 = vector.shape_cast %20 : vector<1x1x32x64xf32> to vector<32x64xf32>
    %c0_16 = arith.constant 0 : index
    %c1_17 = arith.constant 1 : index
    %22 = arith.index_cast %15 : i32 to index
    %c0_18 = arith.constant 0 : index
    %23 = vector.load %arg3[%c0_16, %c1_17, %22, %c0_18] : memref<1x3x64x64xf32, #tpu.memory_space<vmem>>, vector<1x1x32x64xf32>
    %24 = vector.shape_cast %23 : vector<1x1x32x64xf32> to vector<32x64xf32>
    %c0_19 = arith.constant 0 : index
    %c2_20 = arith.constant 2 : index
    %25 = arith.index_cast %15 : i32 to index
    %c0_21 = arith.constant 0 : index
    %26 = vector.load %arg3[%c0_19, %c2_20, %25, %c0_21] : memref<1x3x64x64xf32, #tpu.memory_space<vmem>>, vector<1x1x32x64xf32>
    %27 = vector.shape_cast %26 : vector<1x1x32x64xf32> to vector<32x64xf32>
    %28 = tpu.iota {dimensions = array<i32: 0>} : vector<32x64xi32>
    %29 = tpu.iota {dimensions = array<i32: 1>} : vector<32x64xi32>
    %30 = vector.broadcast %16 : i32 to vector<32x64xi32>
    %31 = arith.cmpi sge, %28, %30 : vector<32x64xi32>
    %32 = arith.addi %16, %4 : i32
    %33 = vector.broadcast %32 : i32 to vector<32x64xi32>
    %34 = arith.cmpi slt, %28, %33 : vector<32x64xi32>
    %35 = arith.andi %31, %34 : vector<32x64xi1>
    %36 = vector.broadcast %1 : i32 to vector<32x64xi32>
    %37 = arith.cmpi sge, %29, %36 : vector<32x64xi32>
    %38 = arith.andi %35, %37 : vector<32x64xi1>
    %39 = arith.addi %1, %5 : i32
    %40 = vector.broadcast %39 : i32 to vector<32x64xi32>
    %41 = arith.cmpi slt, %29, %40 : vector<32x64xi32>
    %42 = arith.andi %38, %41 : vector<32x64xi1>
    %43 = arith.muli %4, %5 : i32
    %44 = arith.sitofp %43 : i32 to f32
    %45 = arith.maximumf %21, %24 : vector<32x64xf32>
    %46 = arith.maximumf %45, %27 : vector<32x64xf32>
    %47 = arith.minimumf %21, %24 : vector<32x64xf32>
    %48 = arith.minimumf %47, %27 : vector<32x64xf32>
    %49 = arith.cmpf oeq, %46, %48 : vector<32x64xf32>
    %50 = arith.subf %46, %48 : vector<32x64xf32>
    %cst = arith.constant 1.000000e+00 : f32
    %51 = vector.broadcast %cst : f32 to vector<32x64xf32>
    %52 = arith.select %49, %51, %46 : vector<32x64xi1>, vector<32x64xf32>
    %53 = arith.divf %50, %52 : vector<32x64xf32>
    %54 = arith.select %49, %51, %50 : vector<32x64xi1>, vector<32x64xf32>
    %55 = arith.subf %46, %21 : vector<32x64xf32>
    %56 = arith.divf %55, %54 : vector<32x64xf32>
    %57 = arith.subf %46, %24 : vector<32x64xf32>
    %58 = arith.divf %57, %54 : vector<32x64xf32>
    %59 = arith.subf %46, %27 : vector<32x64xf32>
    %60 = arith.divf %59, %54 : vector<32x64xf32>
    %61 = arith.cmpf oeq, %46, %21 : vector<32x64xf32>
    %62 = arith.subf %60, %58 : vector<32x64xf32>
    %cst_22 = arith.constant 0.000000e+00 : f32
    %63 = vector.broadcast %cst_22 : f32 to vector<32x64xf32>
    %64 = arith.select %61, %62, %63 : vector<32x64xi1>, vector<32x64xf32>
    %65 = arith.cmpf oeq, %46, %24 : vector<32x64xf32>
    %66 = arith.cmpf one, %46, %21 : vector<32x64xf32>
    %67 = arith.andi %65, %66 : vector<32x64xi1>
    %cst_23 = arith.constant 2.000000e+00 : f32
    %68 = vector.broadcast %cst_23 : f32 to vector<32x64xf32>
    %69 = arith.addf %68, %56 : vector<32x64xf32>
    %70 = arith.subf %69, %60 : vector<32x64xf32>
    %cst_24 = arith.constant 0.000000e+00 : f32
    %71 = vector.broadcast %cst_24 : f32 to vector<32x64xf32>
    %72 = arith.select %67, %70, %71 : vector<32x64xi1>, vector<32x64xf32>
    %73 = arith.cmpf one, %46, %24 : vector<32x64xf32>
    %74 = arith.cmpf one, %46, %21 : vector<32x64xf32>
    %75 = arith.andi %73, %74 : vector<32x64xi1>
    %cst_25 = arith.constant 4.000000e+00 : f32
    %76 = vector.broadcast %cst_25 : f32 to vector<32x64xf32>
    %77 = arith.addf %76, %58 : vector<32x64xf32>
    %78 = arith.subf %77, %56 : vector<32x64xf32>
    %cst_26 = arith.constant 0.000000e+00 : f32
    %79 = vector.broadcast %cst_26 : f32 to vector<32x64xf32>
    %80 = arith.select %75, %78, %79 : vector<32x64xi1>, vector<32x64xf32>
    %81 = arith.addf %64, %72 : vector<32x64xf32>
    %82 = arith.addf %81, %80 : vector<32x64xf32>
    %cst_27 = arith.constant 6.000000e+00 : f32
    %83 = vector.broadcast %cst_27 : f32 to vector<32x64xf32>
    %84 = arith.divf %82, %83 : vector<32x64xf32>
    %cst_28 = arith.constant 1.000000e+00 : f32
    %85 = vector.broadcast %cst_28 : f32 to vector<32x64xf32>
    %86 = arith.addf %84, %85 : vector<32x64xf32>
    %87 = math.floor %86 : vector<32x64xf32>
    %88 = arith.subf %86, %87 : vector<32x64xf32>
    %89 = vector.broadcast %9 : f32 to vector<32x64xf32>
    %90 = arith.addf %88, %89 : vector<32x64xf32>
    %91 = math.floor %90 : vector<32x64xf32>
    %92 = arith.subf %90, %91 : vector<32x64xf32>
    %cst_29 = arith.constant 6.000000e+00 : f32
    %93 = vector.broadcast %cst_29 : f32 to vector<32x64xf32>
    %94 = arith.mulf %92, %93 : vector<32x64xf32>
    %95 = math.floor %94 : vector<32x64xf32>
    %cst_30 = arith.constant 6.000000e+00 : f32
    %96 = vector.broadcast %cst_30 : f32 to vector<32x64xf32>
    %97 = arith.mulf %92, %96 : vector<32x64xf32>
    %98 = arith.subf %97, %95 : vector<32x64xf32>
    %cst_31 = arith.constant 1.000000e+00 : f32
    %99 = vector.broadcast %cst_31 : f32 to vector<32x64xf32>
    %100 = arith.subf %99, %53 : vector<32x64xf32>
    %101 = arith.mulf %46, %100 : vector<32x64xf32>
    %cst_32 = arith.constant 0.000000e+00 : f32
    %cst_33 = arith.constant 1.000000e+00 : f32
    %102 = vector.broadcast %cst_32 : f32 to vector<32x64xf32>
    %103 = arith.maximumf %102, %101 : vector<32x64xf32>
    %104 = vector.broadcast %cst_33 : f32 to vector<32x64xf32>
    %105 = arith.minimumf %104, %103 : vector<32x64xf32>
    %106 = arith.mulf %53, %98 : vector<32x64xf32>
    %cst_34 = arith.constant 1.000000e+00 : f32
    %107 = vector.broadcast %cst_34 : f32 to vector<32x64xf32>
    %108 = arith.subf %107, %106 : vector<32x64xf32>
    %109 = arith.mulf %46, %108 : vector<32x64xf32>
    %cst_35 = arith.constant 0.000000e+00 : f32
    %cst_36 = arith.constant 1.000000e+00 : f32
    %110 = vector.broadcast %cst_35 : f32 to vector<32x64xf32>
    %111 = arith.maximumf %110, %109 : vector<32x64xf32>
    %112 = vector.broadcast %cst_36 : f32 to vector<32x64xf32>
    %113 = arith.minimumf %112, %111 : vector<32x64xf32>
    %cst_37 = arith.constant 1.000000e+00 : f32
    %114 = vector.broadcast %cst_37 : f32 to vector<32x64xf32>
    %115 = arith.subf %114, %98 : vector<32x64xf32>
    %116 = arith.mulf %53, %115 : vector<32x64xf32>
    %cst_38 = arith.constant 1.000000e+00 : f32
    %117 = vector.broadcast %cst_38 : f32 to vector<32x64xf32>
    %118 = arith.subf %117, %116 : vector<32x64xf32>
    %119 = arith.mulf %46, %118 : vector<32x64xf32>
    %cst_39 = arith.constant 0.000000e+00 : f32
    %cst_40 = arith.constant 1.000000e+00 : f32
    %120 = vector.broadcast %cst_39 : f32 to vector<32x64xf32>
    %121 = arith.maximumf %120, %119 : vector<32x64xf32>
    %122 = vector.broadcast %cst_40 : f32 to vector<32x64xf32>
    %123 = arith.minimumf %122, %121 : vector<32x64xf32>
    %cst_41 = arith.constant 0.000000e+00 : f32
    %124 = vector.broadcast %cst_41 : f32 to vector<32x64xf32>
    %125 = arith.cmpf oeq, %95, %124 : vector<32x64xf32>
    %cst_42 = arith.constant 1.000000e+00 : f32
    %126 = vector.broadcast %cst_42 : f32 to vector<32x64xf32>
    %127 = arith.cmpf oeq, %95, %126 : vector<32x64xf32>
    %cst_43 = arith.constant 2.000000e+00 : f32
    %128 = vector.broadcast %cst_43 : f32 to vector<32x64xf32>
    %129 = arith.cmpf oeq, %95, %128 : vector<32x64xf32>
    %cst_44 = arith.constant 3.000000e+00 : f32
    %130 = vector.broadcast %cst_44 : f32 to vector<32x64xf32>
    %131 = arith.cmpf oeq, %95, %130 : vector<32x64xf32>
    %cst_45 = arith.constant 4.000000e+00 : f32
    %132 = vector.broadcast %cst_45 : f32 to vector<32x64xf32>
    %133 = arith.cmpf oeq, %95, %132 : vector<32x64xf32>
    %134 = arith.select %133, %123, %46 : vector<32x64xi1>, vector<32x64xf32>
    %135 = arith.select %131, %105, %134 : vector<32x64xi1>, vector<32x64xf32>
    %136 = arith.select %129, %105, %135 : vector<32x64xi1>, vector<32x64xf32>
    %137 = arith.select %127, %113, %136 : vector<32x64xi1>, vector<32x64xf32>
    %138 = arith.select %125, %46, %137 : vector<32x64xi1>, vector<32x64xf32>
    %139 = arith.select %133, %105, %105 : vector<32x64xi1>, vector<32x64xf32>
    %140 = arith.select %131, %113, %139 : vector<32x64xi1>, vector<32x64xf32>
    %141 = arith.select %129, %46, %140 : vector<32x64xi1>, vector<32x64xf32>
    %142 = arith.select %127, %46, %141 : vector<32x64xi1>, vector<32x64xf32>
    %143 = arith.select %125, %123, %142 : vector<32x64xi1>, vector<32x64xf32>
    %144 = arith.select %133, %46, %113 : vector<32x64xi1>, vector<32x64xf32>
    %145 = arith.select %131, %46, %144 : vector<32x64xi1>, vector<32x64xf32>
    %146 = arith.select %129, %123, %145 : vector<32x64xi1>, vector<32x64xf32>
    %147 = arith.select %127, %105, %146 : vector<32x64xi1>, vector<32x64xf32>
    %148 = arith.select %125, %105, %147 : vector<32x64xi1>, vector<32x64xf32>
    %cst_46 = arith.constant 2.989000e-01 : f32
    %149 = vector.broadcast %cst_46 : f32 to vector<32x64xf32>
    %150 = arith.mulf %149, %138 : vector<32x64xf32>
    %cst_47 = arith.constant 5.870000e-01 : f32
    %151 = vector.broadcast %cst_47 : f32 to vector<32x64xf32>
    %152 = arith.mulf %151, %143 : vector<32x64xf32>
    %153 = arith.addf %150, %152 : vector<32x64xf32>
    %cst_48 = arith.constant 1.140000e-01 : f32
    %154 = vector.broadcast %cst_48 : f32 to vector<32x64xf32>
    %155 = arith.mulf %154, %148 : vector<32x64xf32>
    %156 = arith.addf %153, %155 : vector<32x64xf32>
    %157 = vector.broadcast %8 : f32 to vector<32x64xf32>
    %158 = arith.mulf %157, %138 : vector<32x64xf32>
    %cst_49 = arith.constant 1.000000e+00 : f32
    %159 = arith.subf %cst_49, %8 : f32
    %160 = vector.broadcast %159 : f32 to vector<32x64xf32>
    %161 = arith.mulf %160, %156 : vector<32x64xf32>
    %162 = arith.addf %158, %161 : vector<32x64xf32>
    %cst_50 = arith.constant 0.000000e+00 : f32
    %cst_51 = arith.constant 1.000000e+00 : f32
    %163 = vector.broadcast %cst_50 : f32 to vector<32x64xf32>
    %164 = arith.maximumf %163, %162 : vector<32x64xf32>
    %165 = vector.broadcast %cst_51 : f32 to vector<32x64xf32>
    %166 = arith.minimumf %165, %164 : vector<32x64xf32>
    %167 = vector.broadcast %8 : f32 to vector<32x64xf32>
    %168 = arith.mulf %167, %143 : vector<32x64xf32>
    %cst_52 = arith.constant 1.000000e+00 : f32
    %169 = arith.subf %cst_52, %8 : f32
    %170 = vector.broadcast %169 : f32 to vector<32x64xf32>
    %171 = arith.mulf %170, %156 : vector<32x64xf32>
    %172 = arith.addf %168, %171 : vector<32x64xf32>
    %cst_53 = arith.constant 0.000000e+00 : f32
    %cst_54 = arith.constant 1.000000e+00 : f32
    %173 = vector.broadcast %cst_53 : f32 to vector<32x64xf32>
    %174 = arith.maximumf %173, %172 : vector<32x64xf32>
    %175 = vector.broadcast %cst_54 : f32 to vector<32x64xf32>
    %176 = arith.minimumf %175, %174 : vector<32x64xf32>
    %177 = vector.broadcast %8 : f32 to vector<32x64xf32>
    %178 = arith.mulf %177, %148 : vector<32x64xf32>
    %cst_55 = arith.constant 1.000000e+00 : f32
    %179 = arith.subf %cst_55, %8 : f32
    %180 = vector.broadcast %179 : f32 to vector<32x64xf32>
    %181 = arith.mulf %180, %156 : vector<32x64xf32>
    %182 = arith.addf %178, %181 : vector<32x64xf32>
    %cst_56 = arith.constant 0.000000e+00 : f32
    %cst_57 = arith.constant 1.000000e+00 : f32
    %183 = vector.broadcast %cst_56 : f32 to vector<32x64xf32>
    %184 = arith.maximumf %183, %182 : vector<32x64xf32>
    %185 = vector.broadcast %cst_57 : f32 to vector<32x64xf32>
    %186 = arith.minimumf %185, %184 : vector<32x64xf32>
    %cst_58 = arith.constant 2.989000e-01 : f32
    %187 = vector.broadcast %cst_58 : f32 to vector<32x64xf32>
    %188 = arith.mulf %187, %166 : vector<32x64xf32>
    %cst_59 = arith.constant 5.870000e-01 : f32
    %189 = vector.broadcast %cst_59 : f32 to vector<32x64xf32>
    %190 = arith.mulf %189, %176 : vector<32x64xf32>
    %191 = arith.addf %188, %190 : vector<32x64xf32>
    %cst_60 = arith.constant 1.140000e-01 : f32
    %192 = vector.broadcast %cst_60 : f32 to vector<32x64xf32>
    %193 = arith.mulf %192, %186 : vector<32x64xf32>
    %194 = arith.addf %191, %193 : vector<32x64xf32>
    %cst_61 = arith.constant 0.000000e+00 : f32
    %195 = vector.broadcast %cst_61 : f32 to vector<32x64xf32>
    %196 = arith.select %42, %194, %195 : vector<32x64xi1>, vector<32x64xf32>
    %cst_62 = arith.constant dense<0.000000e+00> : vector<32xf32>
    %197 = vector.multi_reduction <add>, %196, %cst_62 [1] : vector<32x64xf32> to vector<32xf32>
    %198 = vector.shape_cast %197 : vector<32xf32> to vector<32x1xf32>
    %cst_63 = arith.constant dense<0.000000e+00> : vector<1xf32>
    %199 = vector.multi_reduction <add>, %198, %cst_63 [0] : vector<32x1xf32> to vector<1xf32>
    %200 = vector.shape_cast %199 : vector<1xf32> to vector<1x1xf32>
    %201 = vector.broadcast %44 : f32 to vector<1x1xf32>
    %202 = arith.divf %200, %201 : vector<1x1xf32>
    %203 = vector.broadcast %7 : f32 to vector<32x64xf32>
    %204 = arith.mulf %203, %166 : vector<32x64xf32>
    %cst_64 = arith.constant 1.000000e+00 : f32
    %205 = arith.subf %cst_64, %7 : f32
    %206 = vector.broadcast %205 : f32 to vector<1x1xf32>
    %207 = arith.mulf %206, %202 : vector<1x1xf32>
    %208 = vector.broadcast %207 : vector<1x1xf32> to vector<32x64xf32>
    %209 = arith.addf %204, %208 : vector<32x64xf32>
    %cst_65 = arith.constant 0.000000e+00 : f32
    %cst_66 = arith.constant 1.000000e+00 : f32
    %210 = vector.broadcast %cst_65 : f32 to vector<32x64xf32>
    %211 = arith.maximumf %210, %209 : vector<32x64xf32>
    %212 = vector.broadcast %cst_66 : f32 to vector<32x64xf32>
    %213 = arith.minimumf %212, %211 : vector<32x64xf32>
    %214 = vector.broadcast %7 : f32 to vector<32x64xf32>
    %215 = arith.mulf %214, %176 : vector<32x64xf32>
    %cst_67 = arith.constant 1.000000e+00 : f32
    %216 = arith.subf %cst_67, %7 : f32
    %217 = vector.broadcast %216 : f32 to vector<1x1xf32>
    %218 = arith.mulf %217, %202 : vector<1x1xf32>
    %219 = vector.broadcast %218 : vector<1x1xf32> to vector<32x64xf32>
    %220 = arith.addf %215, %219 : vector<32x64xf32>
    %cst_68 = arith.constant 0.000000e+00 : f32
    %cst_69 = arith.constant 1.000000e+00 : f32
    %221 = vector.broadcast %cst_68 : f32 to vector<32x64xf32>
    %222 = arith.maximumf %221, %220 : vector<32x64xf32>
    %223 = vector.broadcast %cst_69 : f32 to vector<32x64xf32>
    %224 = arith.minimumf %223, %222 : vector<32x64xf32>
    %225 = vector.broadcast %7 : f32 to vector<32x64xf32>
    %226 = arith.mulf %225, %186 : vector<32x64xf32>
    %cst_70 = arith.constant 1.000000e+00 : f32
    %227 = arith.subf %cst_70, %7 : f32
    %228 = vector.broadcast %227 : f32 to vector<1x1xf32>
    %229 = arith.mulf %228, %202 : vector<1x1xf32>
    %230 = vector.broadcast %229 : vector<1x1xf32> to vector<32x64xf32>
    %231 = arith.addf %226, %230 : vector<32x64xf32>
    %cst_71 = arith.constant 0.000000e+00 : f32
    %cst_72 = arith.constant 1.000000e+00 : f32
    %232 = vector.broadcast %cst_71 : f32 to vector<32x64xf32>
    %233 = arith.maximumf %232, %231 : vector<32x64xf32>
    %234 = vector.broadcast %cst_72 : f32 to vector<32x64xf32>
    %235 = arith.minimumf %234, %233 : vector<32x64xf32>
    %236 = vector.broadcast %6 : f32 to vector<32x64xf32>
    %237 = arith.mulf %236, %213 : vector<32x64xf32>
    %cst_73 = arith.constant 1.000000e+00 : f32
    %238 = arith.subf %cst_73, %6 : f32
    %cst_74 = arith.constant 0.000000e+00 : f32
    %239 = arith.mulf %238, %cst_74 : f32
    %240 = vector.broadcast %239 : f32 to vector<32x64xf32>
    %241 = arith.addf %237, %240 : vector<32x64xf32>
    %cst_75 = arith.constant 0.000000e+00 : f32
    %cst_76 = arith.constant 1.000000e+00 : f32
    %242 = vector.broadcast %cst_75 : f32 to vector<32x64xf32>
    %243 = arith.maximumf %242, %241 : vector<32x64xf32>
    %244 = vector.broadcast %cst_76 : f32 to vector<32x64xf32>
    %245 = arith.minimumf %244, %243 : vector<32x64xf32>
    %246 = vector.broadcast %6 : f32 to vector<32x64xf32>
    %247 = arith.mulf %246, %224 : vector<32x64xf32>
    %cst_77 = arith.constant 1.000000e+00 : f32
    %248 = arith.subf %cst_77, %6 : f32
    %cst_78 = arith.constant 0.000000e+00 : f32
    %249 = arith.mulf %248, %cst_78 : f32
    %250 = vector.broadcast %249 : f32 to vector<32x64xf32>
    %251 = arith.addf %247, %250 : vector<32x64xf32>
    %cst_79 = arith.constant 0.000000e+00 : f32
    %cst_80 = arith.constant 1.000000e+00 : f32
    %252 = vector.broadcast %cst_79 : f32 to vector<32x64xf32>
    %253 = arith.maximumf %252, %251 : vector<32x64xf32>
    %254 = vector.broadcast %cst_80 : f32 to vector<32x64xf32>
    %255 = arith.minimumf %254, %253 : vector<32x64xf32>
    %256 = vector.broadcast %6 : f32 to vector<32x64xf32>
    %257 = arith.mulf %256, %235 : vector<32x64xf32>
    %cst_81 = arith.constant 1.000000e+00 : f32
    %258 = arith.subf %cst_81, %6 : f32
    %cst_82 = arith.constant 0.000000e+00 : f32
    %259 = arith.mulf %258, %cst_82 : f32
    %260 = vector.broadcast %259 : f32 to vector<32x64xf32>
    %261 = arith.addf %257, %260 : vector<32x64xf32>
    %cst_83 = arith.constant 0.000000e+00 : f32
    %cst_84 = arith.constant 1.000000e+00 : f32
    %262 = vector.broadcast %cst_83 : f32 to vector<32x64xf32>
    %263 = arith.maximumf %262, %261 : vector<32x64xf32>
    %264 = vector.broadcast %cst_84 : f32 to vector<32x64xf32>
    %265 = arith.minimumf %264, %263 : vector<32x64xf32>
    %266 = arith.subi %18, %16 : i32
    %267 = arith.subi %3, %1 : i32
    %268 = tpu.iota {dimensions = array<i32: 0>} : vector<32x32xi32>
    %269 = tpu.iota {dimensions = array<i32: 1>} : vector<32x32xi32>
    %270 = vector.broadcast %266 : i32 to vector<32x32xi32>
    %271 = arith.addi %269, %270 : vector<32x32xi32>
    %272 = arith.cmpi eq, %268, %271 : vector<32x32xi32>
    %cst_85 = arith.constant 1.000000e+00 : f32
    %cst_86 = arith.constant 0.000000e+00 : f32
    %273 = vector.broadcast %cst_85 : f32 to vector<32x32xf32>
    %274 = vector.broadcast %cst_86 : f32 to vector<32x32xf32>
    %275 = arith.select %272, %273, %274 : vector<32x32xi1>, vector<32x32xf32>
    %276 = tpu.iota {dimensions = array<i32: 0>} : vector<64x64xi32>
    %277 = tpu.iota {dimensions = array<i32: 1>} : vector<64x64xi32>
    %278 = vector.broadcast %267 : i32 to vector<64x64xi32>
    %279 = arith.addi %276, %278 : vector<64x64xi32>
    %280 = arith.cmpi eq, %277, %279 : vector<64x64xi32>
    %cst_87 = arith.constant 1.000000e+00 : f32
    %cst_88 = arith.constant 0.000000e+00 : f32
    %281 = vector.broadcast %cst_87 : f32 to vector<64x64xf32>
    %282 = vector.broadcast %cst_88 : f32 to vector<64x64xf32>
    %283 = arith.select %280, %281, %282 : vector<64x64xi1>, vector<64x64xf32>
    %284 = vector.broadcast %18 : i32 to vector<32x64xi32>
    %285 = arith.cmpi sge, %28, %284 : vector<32x64xi32>
    %286 = arith.addi %18, %4 : i32
    %287 = vector.broadcast %286 : i32 to vector<32x64xi32>
    %288 = arith.cmpi slt, %28, %287 : vector<32x64xi32>
    %289 = arith.andi %285, %288 : vector<32x64xi1>
    %290 = vector.broadcast %3 : i32 to vector<32x64xi32>
    %291 = arith.cmpi sge, %29, %290 : vector<32x64xi32>
    %292 = arith.andi %289, %291 : vector<32x64xi1>
    %293 = arith.addi %3, %5 : i32
    %294 = vector.broadcast %293 : i32 to vector<32x64xi32>
    %295 = arith.cmpi slt, %29, %294 : vector<32x64xi32>
    %296 = arith.andi %292, %295 : vector<32x64xi1>
    %cst_89 = arith.constant dense<0.000000e+00> : vector<32x64xf32>
    %297 = tpu.matmul %275, %245, %cst_89 {dimension_numbers = #tpu.dot_dimension_numbers<[1], [0], [0], [1], [0, 0, 1, 1], [], []>} : vector<32x32xf32>, vector<32x64xf32>, vector<32x64xf32> -> vector<32x64xf32>
    %cst_90 = arith.constant dense<0.000000e+00> : vector<32x64xf32>
    %298 = tpu.matmul %297, %283, %cst_90 {dimension_numbers = #tpu.dot_dimension_numbers<[1], [0], [0], [1], [0, 0, 1, 1], [], []>} : vector<32x64xf32>, vector<64x64xf32>, vector<32x64xf32> -> vector<32x64xf32>
    %c0_91 = arith.constant 0 : index
    %c0_92 = arith.constant 0 : index
    %299 = arith.index_cast %17 : i32 to index
    %c0_93 = arith.constant 0 : index
    %300 = vector.load %arg3[%c0_91, %c0_92, %299, %c0_93] : memref<1x3x64x64xf32, #tpu.memory_space<vmem>>, vector<1x1x32x64xf32>
    %301 = vector.shape_cast %300 : vector<1x1x32x64xf32> to vector<32x64xf32>
    %302 = arith.select %296, %298, %301 : vector<32x64xi1>, vector<32x64xf32>
    %c0_94 = arith.constant 0 : index
    %c0_95 = arith.constant 0 : index
    %303 = arith.index_cast %17 : i32 to index
    %c0_96 = arith.constant 0 : index
    %304 = vector.load %arg4[%c0_94, %c0_95, %303, %c0_96] : memref<1x3x64x64xf32, #tpu.memory_space<vmem>>, vector<1x1x32x64xf32>
    %305 = vector.shape_cast %304 : vector<1x1x32x64xf32> to vector<32x64xf32>
    %306 = vector.shape_cast %302 : vector<32x64xf32> to vector<1x1x32x64xf32>
    tpu.vector_store %arg4[%c0_94, %c0_95, %303, %c0_96], %306 {strides = array<i32>} : memref<1x3x64x64xf32, #tpu.memory_space<vmem>>, vector<1x1x32x64xf32>,
    %cst_97 = arith.constant dense<0.000000e+00> : vector<32x64xf32>
    %307 = tpu.matmul %275, %255, %cst_97 {dimension_numbers = #tpu.dot_dimension_numbers<[1], [0], [0], [1], [0, 0, 1, 1], [], []>} : vector<32x32xf32>, vector<32x64xf32>, vector<32x64xf32> -> vector<32x64xf32>
    %cst_98 = arith.constant dense<0.000000e+00> : vector<32x64xf32>
    %308 = tpu.matmul %307, %283, %cst_98 {dimension_numbers = #tpu.dot_dimension_numbers<[1], [0], [0], [1], [0, 0, 1, 1], [], []>} : vector<32x64xf32>, vector<64x64xf32>, vector<32x64xf32> -> vector<32x64xf32>
    %c0_99 = arith.constant 0 : index
    %c1_100 = arith.constant 1 : index
    %309 = arith.index_cast %17 : i32 to index
    %c0_101 = arith.constant 0 : index
    %310 = vector.load %arg3[%c0_99, %c1_100, %309, %c0_101] : memref<1x3x64x64xf32, #tpu.memory_space<vmem>>, vector<1x1x32x64xf32>
    %311 = vector.shape_cast %310 : vector<1x1x32x64xf32> to vector<32x64xf32>
    %312 = arith.select %296, %308, %311 : vector<32x64xi1>, vector<32x64xf32>
    %c0_102 = arith.constant 0 : index
    %c1_103 = arith.constant 1 : index
    %313 = arith.index_cast %17 : i32 to index
    %c0_104 = arith.constant 0 : index
    %314 = vector.load %arg4[%c0_102, %c1_103, %313, %c0_104] : memref<1x3x64x64xf32, #tpu.memory_space<vmem>>, vector<1x1x32x64xf32>
    %315 = vector.shape_cast %314 : vector<1x1x32x64xf32> to vector<32x64xf32>
    %316 = vector.shape_cast %312 : vector<32x64xf32> to vector<1x1x32x64xf32>
    tpu.vector_store %arg4[%c0_102, %c1_103, %313, %c0_104], %316 {strides = array<i32>} : memref<1x3x64x64xf32, #tpu.memory_space<vmem>>, vector<1x1x32x64xf32>,
    %cst_105 = arith.constant dense<0.000000e+00> : vector<32x64xf32>
    %317 = tpu.matmul %275, %265, %cst_105 {dimension_numbers = #tpu.dot_dimension_numbers<[1], [0], [0], [1], [0, 0, 1, 1], [], []>} : vector<32x32xf32>, vector<32x64xf32>, vector<32x64xf32> -> vector<32x64xf32>
    %cst_106 = arith.constant dense<0.000000e+00> : vector<32x64xf32>
    %318 = tpu.matmul %317, %283, %cst_106 {dimension_numbers = #tpu.dot_dimension_numbers<[1], [0], [0], [1], [0, 0, 1, 1], [], []>} : vector<32x64xf32>, vector<64x64xf32>, vector<32x64xf32> -> vector<32x64xf32>
    %c0_107 = arith.constant 0 : index
    %c2_108 = arith.constant 2 : index
    %319 = arith.index_cast %17 : i32 to index
    %c0_109 = arith.constant 0 : index
    %320 = vector.load %arg3[%c0_107, %c2_108, %319, %c0_109] : memref<1x3x64x64xf32, #tpu.memory_space<vmem>>, vector<1x1x32x64xf32>
    %321 = vector.shape_cast %320 : vector<1x1x32x64xf32> to vector<32x64xf32>
    %322 = arith.select %296, %318, %321 : vector<32x64xi1>, vector<32x64xf32>
    %c0_110 = arith.constant 0 : index
    %c2_111 = arith.constant 2 : index
    %323 = arith.index_cast %17 : i32 to index
    %c0_112 = arith.constant 0 : index
    %324 = vector.load %arg4[%c0_110, %c2_111, %323, %c0_112] : memref<1x3x64x64xf32, #tpu.memory_space<vmem>>, vector<1x1x32x64xf32>
    %325 = vector.shape_cast %324 : vector<1x1x32x64xf32> to vector<32x64xf32>
    %326 = vector.shape_cast %322 : vector<32x64xf32> to vector<1x1x32x64xf32>
    tpu.vector_store %arg4[%c0_110, %c2_111, %323, %c0_112], %326 {strides = array<i32>} : memref<1x3x64x64xf32, #tpu.memory_space<vmem>>, vector<1x1x32x64xf32>,
    return
  }
  func.func @transform_0(%arg0: i32) -> i32 {
    %c0_i32 = arith.constant 0 : i32
    %c0_i32_0 = arith.constant 0 : i32
    return %c0_i32 : i32
  }
  func.func @transform_1(%arg0: i32) -> i32 {
    %c0_i32 = arith.constant 0 : i32
    %c0_i32_0 = arith.constant 0 : i32
    return %c0_i32 : i32
  }
  func.func @transform_2(%arg0: i32) -> (i32, i32, i32, i32) {
    %c0_i32 = arith.constant 0 : i32
    %c0_i32_0 = arith.constant 0 : i32
    %c0_i32_1 = arith.constant 0 : i32
    %c0_i32_2 = arith.constant 0 : i32
    return %arg0, %c0_i32, %c0_i32_0, %c0_i32_1 : i32, i32, i32, i32
  }
  func.func @transform_3(%arg0: i32) -> (i32, i32, i32, i32) {
    %c0_i32 = arith.constant 0 : i32
    %c0_i32_0 = arith.constant 0 : i32
    %c0_i32_1 = arith.constant 0 : i32
    %c0_i32_2 = arith.constant 0 : i32
    return %arg0, %c0_i32, %c0_i32_0, %c0_i32_1 : i32, i32, i32, i32
  }
}

</mosaic_0001>

<llo_original>
// kernel: tpu_custom_call.1
$region0: #{tpu_custom_call.1}
  #allocation0 [shape = 'u32[]', space=smem, size = 0x4, offset = 0x4, fixed_abs, tag = 'smem constant byte address 0x4 - core index']
  #allocation1 [shape = 'u32[144,128]{1,0:T(1,128)}', space=vmem, size = 0x12000, scoped, tag = 'internal scratch']
  %s0 = inlined_call_operand.hbm [shape: s32[6], index: 0, kind: input, shape index: {}]
  %s1 = inlined_call_operand.vmem [shape: f32[4], index: 1, kind: input, shape index: {}]
  %s2 = inlined_call_operand.hbm [shape: f32[2,3,64,64], index: 2, kind: input, shape index: {}]
  %s3 = inlined_call_operand.hbm [shape: f32[2,3,64,64], index: 3, kind: output, shape index: {}]
  %s4 = sld [smem:[#allocation0]]
  $region57: #{tpu_custom_call.1} parent=0
    _
  %s6 = ssub.s32 1, %s4
  %s7 = scalar_select 0, %s6, %s4
  $region1: #{tpu_custom_call.1} parent=0
    #allocation2 [shape = 'u8[512]{0}', space=smem, size = 0x200, scoped, tag = 'input window, operand 0, single buffered']
    #allocation3 [shape = 's32[2]{0}', space=sflag, size = 0x8, scoped, tag = 'scoped memory for tpu_custom_call.1']
    #allocation4 [shape = 's32[2]{0}', space=sflag, size = 0x8, scoped, tag = 'scoped memory for tpu_custom_call.1']
    #allocation5 [shape = 's32[2]{0}', space=sflag, size = 0x8, scoped, tag = 'scoped memory for tpu_custom_call.1']
    #allocation6 [shape = 's32[2]{0}', space=sflag, size = 0x8, scoped, tag = 'scoped memory for tpu_custom_call.1']
    #allocation7 [shape = 'u8[512]{0}', space=smem, size = 0x200, scoped, tag = 'input window, operand 1, single buffered']
    #allocation8 [shape = 'u8[196608]{0}', space=vmem, size = 0x30000, scoped, tag = 'input window, operand 2']
    #allocation9 [shape = 'u8[196608]{0}', space=vmem, size = 0x30000, scoped, tag = 'output window, operand 0']
    %8 = vsyncpa [#allocation5], 0
    %9 = vsyncpa [#allocation6], 0
    %10 = vsyncpa [#allocation3], 0
    %s11 = scalar_lea.sflag [#allocation3], 1
    %12 = vsyncpa %s11, 0
    %13 = vsyncpa [#allocation4], 0
    %s14 = scalar_lea.sflag [#allocation4], 1
    %15 = vsyncpa %s14, 0
    loop: start=0, step=1, limit=4
    $region2: #{tpu_custom_call.1} parent=1 // loop_pre_header
      _
    $region3: #{tpu_custom_call.1} parent=1 // loop_header
      %s17 = sphi 0, %s21
      %p18 = scmp.ge.s32.totalorder %s17, 4
      %s25 = sphi 0, %s25
      %s27 = sphi 0, %s25
      %s28 = sphi 0, %s27
      %s42 = sphi 0, %s28
      %s46 = sphi 0, %s46
      %s48 = sphi 0, %s46
      %s49 = sphi 0, %s48
      %s63 = sphi 0, %s49
      %s69 = sphi 0, %s71
      %s72 = sphi 0, %s69
      %s73 = sphi 0, %s72
      %s89 = sphi 0, %s73
      %s95 = sphi 0, %s97
      %s98 = sphi 0, %s95
      %s99 = sphi 0, %s98
      %s115 = sphi 0, %s99
    $region4: #{tpu_custom_call.1} parent=1 // loop_header_branch
      %20 = sbr.rel (%p18) target = $region8
    $region5: #{tpu_custom_call.1} parent=1 // loop_body
      %s22 = ssub.s32 %s17, 1
      %s23 = ssub.s32 %s17, 2
      %s24 = sadd.s32 %s17, 1
      %s26 = sadd.s32 %s25, 1
      %p29 = scmp.eq.s32.totalorder %s17, 1
      %p30 = scmp.ne.s32.totalorder %s25, %s27
      %p31 = scmp.eq.s32.totalorder %s17, 0
      %p32 = por %p30, %p31
      %p33 = scmp.ne.s32.totalorder %s25, %s27
      %p34 = scmp.eq.s32.totalorder %s22, 1
      %p35 = por %p33, %p34
      %p36 = scmp.ne.s32.totalorder %s27, %s28
      %p37 = scmp.eq.s32.totalorder %s22, 0
      %p38 = por %p36, %p37
      %p39 = scmp.ne.s32.totalorder %s27, %s28
      %p40 = scmp.eq.s32.totalorder %s23, 1
      %p41 = por %p39, %p40
      %p43 = scmp.ne.s32.totalorder %s28, %s42
      %p44 = scmp.eq.s32.totalorder %s23, 0
      %p45 = por %p43, %p44
      %s47 = sadd.s32 %s46, 1
      %p50 = scmp.eq.s32.totalorder %s17, 1
      %p51 = scmp.ne.s32.totalorder %s46, %s48
      %p52 = scmp.eq.s32.totalorder %s17, 0
      %p53 = por %p51, %p52
      %p54 = scmp.ne.s32.totalorder %s46, %s48
      %p55 = scmp.eq.s32.totalorder %s22, 1
      %p56 = por %p54, %p55
      %p57 = scmp.ne.s32.totalorder %s48, %s49
      %p58 = scmp.eq.s32.totalorder %s22, 0
      %p59 = por %p57, %p58
      %p60 = scmp.ne.s32.totalorder %s48, %s49
      %p61 = scmp.eq.s32.totalorder %s23, 1
      %p62 = por %p60, %p61
      %p64 = scmp.ne.s32.totalorder %s49, %s63
      %p65 = scmp.eq.s32.totalorder %s23, 0
      %p66 = por %p64, %p65
      %s67 = ssub.s32 %s17, %s24
      %p68 = scmp.eq.s32.totalorder %s67, 0
      %s70 = sadd.s32 %s69, 1
      %s71 = scalar_select %p68, %s69, %s70
      %p74 = pneg %p68
      %p75 = scmp.eq.s32.totalorder %s17, 1
      %p76 = por %p74, %p75
      %p77 = scmp.ne.s32.totalorder %s69, %s72
      %p78 = scmp.eq.s32.totalorder %s17, 0
      %p79 = por %p77, %p78
      %p80 = scmp.ne.s32.totalorder %s69, %s72
      %p81 = scmp.eq.s32.totalorder %s22, 1
      %p82 = por %p80, %p81
      %p83 = scmp.ne.s32.totalorder %s72, %s73
      %p84 = scmp.eq.s32.totalorder %s22, 0
      %p85 = por %p83, %p84
      %p86 = scmp.ne.s32.totalorder %s72, %s73
      %p87 = scmp.eq.s32.totalorder %s23, 1
      %p88 = por %p86, %p87
      %p90 = scmp.ne.s32.totalorder %s73, %s89
      %p91 = scmp.eq.s32.totalorder %s23, 0
      %p92 = por %p90, %p91
      %s93 = ssub.s32 %s17, %s24
      %p94 = scmp.eq.s32.totalorder %s93, 0
      %s96 = sadd.s32 %s95, 1
      %s97 = scalar_select %p94, %s95, %s96
      %p100 = pneg %p94
      %p101 = scmp.eq.s32.totalorder %s17, 1
      %p102 = por %p100, %p101
      %p103 = scmp.ne.s32.totalorder %s95, %s98
      %p104 = scmp.eq.s32.totalorder %s17, 0
      %p105 = por %p103, %p104
      %p106 = scmp.ne.s32.totalorder %s95, %s98
      %p107 = scmp.eq.s32.totalorder %s22, 1
      %p108 = por %p106, %p107
      %p109 = scmp.ne.s32.totalorder %s98, %s99
      %p110 = scmp.eq.s32.totalorder %s22, 0
      %p111 = por %p109, %p110
      %p112 = scmp.ne.s32.totalorder %s98, %s99
      %p113 = scmp.eq.s32.totalorder %s23, 1
      %p114 = por %p112, %p113
      %p116 = scmp.ne.s32.totalorder %s99, %s115
      %p117 = scmp.eq.s32.totalorder %s23, 0
      %p118 = por %p116, %p117
      %p119 = scmp.le.s32.totalorder 1, %s17
      %p120 = scmp.lt.s32.totalorder %s17, 3
      %p121 = pnand %p119, %p120
      %p122 = pneg %p121
      // Predicated region
      $region9: #{tpu_custom_call.1} parent=5 // pred_check
        _
      $region10: #{tpu_custom_call.1} parent=5 // pred_check_branch
        %124 = sbr.rel (%p121) target = $region12
      $region11: #{tpu_custom_call.1} parent=5 // pred_region
        %s125 = ssub.s32 %s17, 1
        // Predicated region
        $region13: #{tpu_custom_call.1} parent=11 // pred_check
          %p126 = pneg %p38
        $region14: #{tpu_custom_call.1} parent=11 // pred_check_branch
          %128 = sbr.rel (%p126) target = $region16
        $region15: #{tpu_custom_call.1} parent=11 // pred_region
          %s130 = ssub.s32 16, 16
          %131 = vsyncadd [#allocation5], %s130
          %134 = dma.hbm_to_smem %s0, 16, [#allocation2], [#allocation5]
        $region16: #{tpu_custom_call.1} parent=11 // pred_fallthru
          _
        // Predicated region
        $region17: #{tpu_custom_call.1} parent=11 // pred_check
          %p135 = pneg %p59
        $region18: #{tpu_custom_call.1} parent=11 // pred_check_branch
          %137 = sbr.rel (%p135) target = $region20
        $region19: #{tpu_custom_call.1} parent=11 // pred_region
          %s139 = ssub.s32 16, 16
          %140 = vsyncadd [#allocation6], %s139
          %s142 = sshll.u32 %s1, 4
          %s143 = int_to_ptr.vmem [resolvable:$true] %s142
          %145 = dma.vmem_to_smem %s143, 16, [#allocation7], [#allocation6]
        $region20: #{tpu_custom_call.1} parent=11 // pred_fallthru
          _
      $region12: #{tpu_custom_call.1} parent=5 // pred_fallthru
        _
      %p146 = scmp.lt.s32.totalorder %s17, 2
      // Predicated region
      $region21: #{tpu_custom_call.1} parent=5 // pred_check
        %p147 = pneg %p146
      $region22: #{tpu_custom_call.1} parent=5 // pred_check_branch
        %149 = sbr.rel (%p147) target = $region24
      $region23: #{tpu_custom_call.1} parent=5 // pred_region
        // Predicated region
        $region25: #{tpu_custom_call.1} parent=23 // pred_check
          %p150 = pneg %p79
        $region26: #{tpu_custom_call.1} parent=23 // pred_check_branch
          %152 = sbr.rel (%p150) target = $region28
        $region27: #{tpu_custom_call.1} parent=23 // pred_region
          %s153 = sand.u32 %s69, 1
          %s154 = scalar_lea.sflag [#allocation3], %s153
          %s155 = sand.u32 %s69, 1
          %s156 = smul.addr %s155, 192
          %s157 = scalar_lea.vmem [#allocation8], %s156
          %s159 = ssub.s32 3072, 3072
          %160 = vsyncadd %s154, %s159
          %s161 = smul.addr %s17, 24
          %s162 = smul.addr %s161, 128
          %s163 = scalar_lea.hbm %s2, %s162
          %s164 = sshll.u32 %s157, 4
          %s165 = int_to_ptr.vmem [resolvable:$true] %s164
          %170 = dma.hbm_to_vmem [thread:$0]  %s163, 3072, %s165, %s154, 128, 128, 8
        $region28: #{tpu_custom_call.1} parent=23 // pred_fallthru
          _
      $region24: #{tpu_custom_call.1} parent=5 // pred_fallthru
        _
      %p171 = scmp.le.s32.totalorder 1, %s17
      %p172 = scmp.lt.s32.totalorder %s17, 3
      %p173 = pnand %p171, %p172
      %p174 = pneg %p173
      // Predicated region
      $region29: #{tpu_custom_call.1} parent=5 // pred_check
        _
      $region30: #{tpu_custom_call.1} parent=5 // pred_check_branch
        %176 = sbr.rel (%p173) target = $region32
      $region31: #{tpu_custom_call.1} parent=5 // pred_region
        %s177 = ssub.s32 %s17, 1
        // Predicated region
        $region33: #{tpu_custom_call.1} parent=31 // pred_check
          %p178 = pneg %p38
        $region34: #{tpu_custom_call.1} parent=31 // pred_check_branch
          %180 = sbr.rel (%p178) target = $region36
        $region35: #{tpu_custom_call.1} parent=31 // pred_region
          %181 = dma.done [#allocation5], 16
        $region36: #{tpu_custom_call.1} parent=31 // pred_fallthru
          _
        // Predicated region
        $region37: #{tpu_custom_call.1} parent=31 // pred_check
          %p182 = pneg %p59
        $region38: #{tpu_custom_call.1} parent=31 // pred_check_branch
          %184 = sbr.rel (%p182) target = $region40
        $region39: #{tpu_custom_call.1} parent=31 // pred_region
          %185 = dma.done [#allocation6], 16
        $region40: #{tpu_custom_call.1} parent=31 // pred_fallthru
          _
        %s186 = sand.u32 %s72, 1
        %s187 = scalar_lea.sflag [#allocation3], %s186
        %s188 = sand.u32 %s72, 1
        %s189 = smul.addr %s188, 192
        %s190 = scalar_lea.vmem [#allocation8], %s189
        // Predicated region
        $region41: #{tpu_custom_call.1} parent=31 // pred_check
          %p191 = pneg %p85
        $region42: #{tpu_custom_call.1} parent=31 // pred_check_branch
          %193 = sbr.rel (%p191) target = $region44
        $region43: #{tpu_custom_call.1} parent=31 // pred_region
          %194 = dma.done %s187, 3072
        $region44: #{tpu_custom_call.1} parent=31 // pred_fallthru
          _
        %195 = sfence
        %p196 = pneg %p38
        %p197 = pneg %p35
        %p198 = pneg %p59
        %p199 = pneg %p56
        %s200 = sand.u32 %s72, 1
        %s201 = scalar_lea.sflag [#allocation3], %s200
        %s202 = sand.u32 %s72, 1
        %s203 = smul.addr %s202, 192
        %s204 = scalar_lea.vmem [#allocation8], %s203
        %p205 = pneg %p85
        %p206 = pneg %p82
        %p207 = pneg %p111
        %p208 = pneg %p108
        %s209 = sand.u32 %s98, 1
        %s210 = scalar_lea.sflag [#allocation4], %s209
        %s211 = sand.u32 %s98, 1
        %s212 = smul.addr %s211, 192
        %s213 = scalar_lea.vmem [#allocation9], %s212
        %s214 = sld [smem:[#allocation2]]
        %s215 = sld [smem:[#allocation2 + $0x1]]
        %s216 = sld [smem:[#allocation2 + $0x2]]
        %s217 = sld [smem:[#allocation2 + $0x3]]
        %s218 = sld [smem:[#allocation2 + $0x4]]
        %s219 = sld [smem:[#allocation2 + $0x5]]
        %s220 = sld [smem:[#allocation7]]
        %s221 = sld [smem:[#allocation7 + $0x1]]
        %s222 = sld [smem:[#allocation7 + $0x2]]
        %s223 = sld [smem:[#allocation7 + $0x3]]
        %v224 = vld [vmem:[%s190] sm:$0xff]
        %v225 = vld [vmem:[%s190 + $0x8] sm:$0xff]
        %v226 = vld [vmem:[%s190 + $0x10] sm:$0xff]
        %v227 = vld [vmem:[%s190 + $0x18] sm:$0xff]
        %v228 = vld [vmem:[%s190 + $0x20] sm:$0xff]
        %v229 = vld [vmem:[%s190 + $0x28] sm:$0xff]
        %v230 = vld [vmem:[%s190 + $0x30] sm:$0xff]
        %v231 = vld [vmem:[%s190 + $0x38] sm:$0xff]
        %v232 = vld [vmem:[%s190 + $0x40] sm:$0xff]
        %v233 = vld [vmem:[%s190 + $0x48] sm:$0xff]
        %v234 = vld [vmem:[%s190 + $0x50] sm:$0xff]
        %v235 = vld [vmem:[%s190 + $0x58] sm:$0xff]
        %v236 = vld [vmem:[%s190 + $0x60] sm:$0xff]
        %v237 = vld [vmem:[%s190 + $0x68] sm:$0xff]
        %v238 = vld [vmem:[%s190 + $0x70] sm:$0xff]
        %v239 = vld [vmem:[%s190 + $0x78] sm:$0xff]
        %v240 = vld [vmem:[%s190 + $0x80] sm:$0xff]
        %v241 = vld [vmem:[%s190 + $0x88] sm:$0xff]
        %v242 = vld [vmem:[%s190 + $0x90] sm:$0xff]
        %v243 = vld [vmem:[%s190 + $0x98] sm:$0xff]
        %v244 = vld [vmem:[%s190 + $0xa0] sm:$0xff]
        %v245 = vld [vmem:[%s190 + $0xa8] sm:$0xff]
        %v246 = vld [vmem:[%s190 + $0xb0] sm:$0xff]
        %v247 = vld [vmem:[%s190 + $0xb8] sm:$0xff]
        %vm248 = vcmask 523264
        %249 = vst.msk [vmem:[%s213] sm:$0xff] %vm248, %v224
        %250 = vst.msk [vmem:[%s213 + $0x8] sm:$0xff] %vm248, %v225
        %251 = vst.msk [vmem:[%s213 + $0x10] sm:$0xff] %vm248, %v226
        %252 = vst.msk [vmem:[%s213 + $0x18] sm:$0xff] %vm248, %v227
        %253 = vst.msk [vmem:[%s213 + $0x20] sm:$0xff] %vm248, %v228
        %254 = vst.msk [vmem:[%s213 + $0x28] sm:$0xff] %vm248, %v229
        %255 = vst.msk [vmem:[%s213 + $0x30] sm:$0xff] %vm248, %v230
        %256 = vst.msk [vmem:[%s213 + $0x38] sm:$0xff] %vm248, %v231
        %257 = vst.msk [vmem:[%s213 + $0x40] sm:$0xff] %vm248, %v232
        %258 = vst.msk [vmem:[%s213 + $0x48] sm:$0xff] %vm248, %v233
        %259 = vst.msk [vmem:[%s213 + $0x50] sm:$0xff] %vm248, %v234
        %260 = vst.msk [vmem:[%s213 + $0x58] sm:$0xff] %vm248, %v235
        %261 = vst.msk [vmem:[%s213 + $0x60] sm:$0xff] %vm248, %v236
        %262 = vst.msk [vmem:[%s213 + $0x68] sm:$0xff] %vm248, %v237
        %263 = vst.msk [vmem:[%s213 + $0x70] sm:$0xff] %vm248, %v238
        %264 = vst.msk [vmem:[%s213 + $0x78] sm:$0xff] %vm248, %v239
        %265 = vst.msk [vmem:[%s213 + $0x80] sm:$0xff] %vm248, %v240
        %266 = vst.msk [vmem:[%s213 + $0x88] sm:$0xff] %vm248, %v241
        %267 = vst.msk [vmem:[%s213 + $0x90] sm:$0xff] %vm248, %v242
        %268 = vst.msk [vmem:[%s213 + $0x98] sm:$0xff] %vm248, %v243
        %269 = vst.msk [vmem:[%s213 + $0xa0] sm:$0xff] %vm248, %v244
        %270 = vst.msk [vmem:[%s213 + $0xa8] sm:$0xff] %vm248, %v245
        %271 = vst.msk [vmem:[%s213 + $0xb0] sm:$0xff] %vm248, %v246
        %272 = vst.msk [vmem:[%s213 + $0xb8] sm:$0xff] %vm248, %v247
        %p273 = scmp.lt.s32.totalorder %s214, 32
        %s274 = scalar_select %p273, %s214, 32
        %s275 = ssub.s32 %s214, %s274
        %p276 = scmp.lt.s32.totalorder %s216, 32
        %s277 = scalar_select %p276, %s216, 32
        %s278 = ssub.s32 %s216, %s277
        %s279 = scalar_lea.vmem %s190, %s274 [#allocation8]
        %v280 = vld [vmem:[%s279] sm:$0xff]
        %v281 = vld [vmem:[%s279 + $0x8] sm:$0xff]
        %v282 = vld [vmem:[%s279 + $0x10] sm:$0xff]
        %v283 = vld [vmem:[%s279 + $0x18] sm:$0xff]
        %s284 = sadd.s32 %s274, 64
        %s285 = scalar_lea.vmem %s190, %s284 [#allocation8]
        %v286 = vld [vmem:[%s285] sm:$0xff]
        %v287 = vld [vmem:[%s285 + $0x8] sm:$0xff]
        %v288 = vld [vmem:[%s285 + $0x10] sm:$0xff]
        %v289 = vld [vmem:[%s285 + $0x18] sm:$0xff]
        %s290 = sadd.s32 %s274, 128
        %s291 = scalar_lea.vmem %s190, %s290 [#allocation8]
        %v292 = vld [vmem:[%s291] sm:$0xff]
        %v293 = vld [vmem:[%s291 + $0x8] sm:$0xff]
        %v294 = vld [vmem:[%s291 + $0x10] sm:$0xff]
        %v295 = vld [vmem:[%s291 + $0x18] sm:$0xff]
        %v296 = vlaneseq
        %v297 = vshrl.u32 %v296, 7
        %v298 = vadd.s32 %v297, 8
        %v299 = vadd.s32 %v297, 16
        %v300 = vadd.s32 %v297, 24
        %v301 = vlaneseq
        %v302 = vand.u32 %v301, 127
        %v303 = vstv %s275
        %vm304 = vcmp.ge.s32.totalorder %v297, %v303
        %vm305 = vcmp.ge.s32.totalorder %v298, %v303
        %vm306 = vcmp.ge.s32.totalorder %v299, %v303
        %vm307 = vcmp.ge.s32.totalorder %v300, %v303
        %s308 = sadd.s32 %s275, %s218
        %v309 = vstv %s308
        %vm310 = vcmp.lt.s32.totalorder %v297, %v309
        %vm311 = vcmp.lt.s32.totalorder %v298, %v309
        %vm312 = vcmp.lt.s32.totalorder %v299, %v309
        %vm313 = vcmp.lt.s32.totalorder %v300, %v309
        %vm314 = vmand %vm304, %vm310
        %vm315 = vmand %vm305, %vm311
        %vm316 = vmand %vm306, %vm312
        %vm317 = vmand %vm307, %vm313
        %v318 = vstv %s215
        %vm319 = vcmp.ge.s32.totalorder %v302, %v318
        %vm320 = vmand %vm314, %vm319
        %vm321 = vmand %vm315, %vm319
        %vm322 = vmand %vm316, %vm319
        %vm323 = vmand %vm317, %vm319
        %s324 = sadd.s32 %s215, %s219
        %v325 = vstv %s324
        %vm326 = vcmp.lt.s32.totalorder %v302, %v325
        %vm327 = vmand %vm320, %vm326
        %vm328 = vmand %vm321, %vm326
        %vm329 = vmand %vm322, %vm326
        %vm330 = vmand %vm323, %vm326
        %s331 = smul.u32 %s218, %s219
        %s332 = scvt.s32.f32 %s331
        %v333 = vmax.f32 %v280, %v286
        %v334 = vmax.f32 %v281, %v287
        %v335 = vmax.f32 %v282, %v288
        %v336 = vmax.f32 %v283, %v289
        %v337 = vmax.f32 %v333, %v292
        %v338 = vmax.f32 %v334, %v293
        %v339 = vmax.f32 %v335, %v294
        %v340 = vmax.f32 %v336, %v295
        %v341 = vmin.f32 %v280, %v286
        %v342 = vmin.f32 %v281, %v287
        %v343 = vmin.f32 %v282, %v288
        %v344 = vmin.f32 %v283, %v289
        %v345 = vmin.f32 %v341, %v292
        %v346 = vmin.f32 %v342, %v293
        %v347 = vmin.f32 %v343, %v294
        %v348 = vmin.f32 %v344, %v295
        %vm349 = vcmp.eq.f32.partialorder %v337, %v345
        %vm350 = vcmp.eq.f32.partialorder %v338, %v346
        %vm351 = vcmp.eq.f32.partialorder %v339, %v347
        %vm352 = vcmp.eq.f32.partialorder %v340, %v348
        %v353 = vsub.f32 %v337, %v345
        %v354 = vsub.f32 %v338, %v346
        %v355 = vsub.f32 %v339, %v347
        %v356 = vsub.f32 %v340, %v348
        %v357 = vsel %vm349, 1.0, %v337
        %v358 = vsel %vm350, 1.0, %v338
        %v359 = vsel %vm351, 1.0, %v339
        %v360 = vsel %vm352, 1.0, %v340
        %v361 = vrcp.pop %v357
        %v362 = vmul.f32 %v353, %v361
        %v363 = vrcp.pop %v358
        %v364 = vmul.f32 %v354, %v363
        %v365 = vrcp.pop %v359
        %v366 = vmul.f32 %v355, %v365
        %v367 = vrcp.pop %v360
        %v368 = vmul.f32 %v356, %v367
        %v369 = vsel %vm349, 1.0, %v353
        %v370 = vsel %vm350, 1.0, %v354
        %v371 = vsel %vm351, 1.0, %v355
        %v372 = vsel %vm352, 1.0, %v356
        %v373 = vsub.f32 %v337, %v280
        %v374 = vsub.f32 %v338, %v281
        %v375 = vsub.f32 %v339, %v282
        %v376 = vsub.f32 %v340, %v283
        %v377 = vrcp.pop %v369
        %v378 = vmul.f32 %v373, %v377
        %v379 = vrcp.pop %v370
        %v380 = vmul.f32 %v374, %v379
        %v381 = vrcp.pop %v371
        %v382 = vmul.f32 %v375, %v381
        %v383 = vrcp.pop %v372
        %v384 = vmul.f32 %v376, %v383
        %v385 = vsub.f32 %v337, %v286
        %v386 = vsub.f32 %v338, %v287
        %v387 = vsub.f32 %v339, %v288
        %v388 = vsub.f32 %v340, %v289
        %v389 = vmul.f32 %v385, %v377
        %v390 = vmul.f32 %v386, %v379
        %v391 = vmul.f32 %v387, %v381
        %v392 = vmul.f32 %v388, %v383
        %v393 = vsub.f32 %v337, %v292
        %v394 = vsub.f32 %v338, %v293
        %v395 = vsub.f32 %v339, %v294
        %v396 = vsub.f32 %v340, %v295
        %v397 = vmul.f32 %v393, %v377
        %v398 = vmul.f32 %v394, %v379
        %v399 = vmul.f32 %v395, %v381
        %v400 = vmul.f32 %v396, %v383
        %vm401 = vcmp.eq.f32.partialorder %v337, %v280
        %vm402 = vcmp.eq.f32.partialorder %v338, %v281
        %vm403 = vcmp.eq.f32.partialorder %v339, %v282
        %vm404 = vcmp.eq.f32.partialorder %v340, %v283
        %v405 = vsub.f32 %v397, %v389
        %v406 = vsub.f32 %v398, %v390
        %v407 = vsub.f32 %v399, %v391
        %v408 = vsub.f32 %v400, %v392
        %v409 = vsel %vm401, %v405, 0.0
        %v410 = vsel %vm402, %v406, 0.0
        %v411 = vsel %vm403, %v407, 0.0
        %v412 = vsel %vm404, %v408, 0.0
        %vm413 = vcmp.eq.f32.partialorder %v337, %v286
        %vm414 = vcmp.eq.f32.partialorder %v338, %v287
        %vm415 = vcmp.eq.f32.partialorder %v339, %v288
        %vm416 = vcmp.eq.f32.partialorder %v340, %v289
        %vm417 = vcmp.ne.f32.partialorder %v337, %v280
        %vm418 = vcmp.ne.f32.partialorder %v338, %v281
        %vm419 = vcmp.ne.f32.partialorder %v339, %v282
        %vm420 = vcmp.ne.f32.partialorder %v340, %v283
        %vm421 = vmand %vm413, %vm417
        %vm422 = vmand %vm414, %vm418
        %vm423 = vmand %vm415, %vm419
        %vm424 = vmand %vm416, %vm420
        %v425 = vadd.f32 %v378, 2.0
        %v426 = vadd.f32 %v380, 2.0
        %v427 = vadd.f32 %v382, 2.0
        %v428 = vadd.f32 %v384, 2.0
        %v429 = vsub.f32 %v425, %v397
        %v430 = vsub.f32 %v426, %v398
        %v431 = vsub.f32 %v427, %v399
        %v432 = vsub.f32 %v428, %v400
        %v433 = vsel %vm421, %v429, 0.0
        %v434 = vsel %vm422, %v430, 0.0
        %v435 = vsel %vm423, %v431, 0.0
        %v436 = vsel %vm424, %v432, 0.0
        %vm437 = vcmp.ne.f32.partialorder %v337, %v286
        %vm438 = vcmp.ne.f32.partialorder %v338, %v287
        %vm439 = vcmp.ne.f32.partialorder %v339, %v288
        %vm440 = vcmp.ne.f32.partialorder %v340, %v289
        %vm441 = vmand %vm437, %vm417
        %vm442 = vmand %vm438, %vm418
        %vm443 = vmand %vm439, %vm419
        %vm444 = vmand %vm440, %vm420
        %v445 = vadd.f32 %v389, 4.0
        %v446 = vadd.f32 %v390, 4.0
        %v447 = vadd.f32 %v391, 4.0
        %v448 = vadd.f32 %v392, 4.0
        %v449 = vsub.f32 %v445, %v378
        %v450 = vsub.f32 %v446, %v380
        %v451 = vsub.f32 %v447, %v382
        %v452 = vsub.f32 %v448, %v384
        %v453 = vsel %vm441, %v449, 0.0
        %v454 = vsel %vm442, %v450, 0.0
        %v455 = vsel %vm443, %v451, 0.0
        %v456 = vsel %vm444, %v452, 0.0
        %v457 = vadd.f32 %v409, %v433
        %v458 = vadd.f32 %v410, %v434
        %v459 = vadd.f32 %v411, %v435
        %v460 = vadd.f32 %v412, %v436
        %v461 = vadd.f32 %v457, %v453
        %v462 = vadd.f32 %v458, %v454
        %v463 = vadd.f32 %v459, %v455
        %v464 = vadd.f32 %v460, %v456
        %v465 = vrcp.pop 6.0
        %v466 = vmul.f32 %v461, %v465
        %v467 = vmul.f32 %v462, %v465
        %v468 = vmul.f32 %v463, %v465
        %v469 = vmul.f32 %v464, %v465
        %v470 = vadd.f32 %v466, 1.0
        %v471 = vadd.f32 %v467, 1.0
        %v472 = vadd.f32 %v468, 1.0
        %v473 = vadd.f32 %v469, 1.0
        %v474 = vfloor.f32 %v470
        %v475 = vfloor.f32 %v471
        %v476 = vfloor.f32 %v472
        %v477 = vfloor.f32 %v473
        %v478 = vsub.f32 %v470, %v474
        %v479 = vsub.f32 %v471, %v475
        %v480 = vsub.f32 %v472, %v476
        %v481 = vsub.f32 %v473, %v477
        %v482 = vstv %s223
        %v483 = vadd.f32 %v478, %v482
        %v484 = vadd.f32 %v479, %v482
        %v485 = vadd.f32 %v480, %v482
        %v486 = vadd.f32 %v481, %v482
        %v487 = vfloor.f32 %v483
        %v488 = vfloor.f32 %v484
        %v489 = vfloor.f32 %v485
        %v490 = vfloor.f32 %v486
        %v491 = vsub.f32 %v483, %v487
        %v492 = vsub.f32 %v484, %v488
        %v493 = vsub.f32 %v485, %v489
        %v494 = vsub.f32 %v486, %v490
        %v495 = vmul.f32 %v491, 6.0
        %v496 = vmul.f32 %v492, 6.0
        %v497 = vmul.f32 %v493, 6.0
        %v498 = vmul.f32 %v494, 6.0
        %v499 = vfloor.f32 %v495
        %v500 = vfloor.f32 %v496
        %v501 = vfloor.f32 %v497
        %v502 = vfloor.f32 %v498
        %v503 = vsub.f32 %v495, %v499
        %v504 = vsub.f32 %v496, %v500
        %v505 = vsub.f32 %v497, %v501
        %v506 = vsub.f32 %v498, %v502
        %v507 = vsub.f32 1.0, %v362
        %v508 = vsub.f32 1.0, %v364
        %v509 = vsub.f32 1.0, %v366
        %v510 = vsub.f32 1.0, %v368
        %v511 = vmul.f32 %v337, %v507
        %v512 = vmul.f32 %v338, %v508
        %v513 = vmul.f32 %v339, %v509
        %v514 = vmul.f32 %v340, %v510
        %v515 = vmax.f32 %v511, 0.0
        %v516 = vmax.f32 %v512, 0.0
        %v517 = vmax.f32 %v513, 0.0
        %v518 = vmax.f32 %v514, 0.0
        %v519 = vmin.f32 %v515, 1.0
        %v520 = vmin.f32 %v516, 1.0
        %v521 = vmin.f32 %v517, 1.0
        %v522 = vmin.f32 %v518, 1.0
        %v523 = vmul.f32 %v362, %v503
        %v524 = vmul.f32 %v364, %v504
        %v525 = vmul.f32 %v366, %v505
        %v526 = vmul.f32 %v368, %v506
        %v527 = vsub.f32 1.0, %v523
        %v528 = vsub.f32 1.0, %v524
        %v529 = vsub.f32 1.0, %v525
        %v530 = vsub.f32 1.0, %v526
        %v531 = vmul.f32 %v337, %v527
        %v532 = vmul.f32 %v338, %v528
        %v533 = vmul.f32 %v339, %v529
        %v534 = vmul.f32 %v340, %v530
        %v535 = vmax.f32 %v531, 0.0
        %v536 = vmax.f32 %v532, 0.0
        %v537 = vmax.f32 %v533, 0.0
        %v538 = vmax.f32 %v534, 0.0
        %v539 = vmin.f32 %v535, 1.0
        %v540 = vmin.f32 %v536, 1.0
        %v541 = vmin.f32 %v537, 1.0
        %v542 = vmin.f32 %v538, 1.0
        %v543 = vsub.f32 1.0, %v503
        %v544 = vsub.f32 1.0, %v504
        %v545 = vsub.f32 1.0, %v505
        %v546 = vsub.f32 1.0, %v506
        %v547 = vmul.f32 %v362, %v543
        %v548 = vmul.f32 %v364, %v544
        %v549 = vmul.f32 %v366, %v545
        %v550 = vmul.f32 %v368, %v546
        %v551 = vsub.f32 1.0, %v547
        %v552 = vsub.f32 1.0, %v548
        %v553 = vsub.f32 1.0, %v549
        %v554 = vsub.f32 1.0, %v550
        %v555 = vmul.f32 %v337, %v551
        %v556 = vmul.f32 %v338, %v552
        %v557 = vmul.f32 %v339, %v553
        %v558 = vmul.f32 %v340, %v554
        %v559 = vmax.f32 %v555, 0.0
        %v560 = vmax.f32 %v556, 0.0
        %v561 = vmax.f32 %v557, 0.0
        %v562 = vmax.f32 %v558, 0.0
        %v563 = vmin.f32 %v559, 1.0
        %v564 = vmin.f32 %v560, 1.0
        %v565 = vmin.f32 %v561, 1.0
        %v566 = vmin.f32 %v562, 1.0
        %vm567 = vcmp.eq.f32.partialorder %v499, 0.0
        %vm568 = vcmp.eq.f32.partialorder %v500, 0.0
        %vm569 = vcmp.eq.f32.partialorder %v501, 0.0
        %vm570 = vcmp.eq.f32.partialorder %v502, 0.0
        %vm571 = vcmp.eq.f32.partialorder %v499, 1.0
        %vm572 = vcmp.eq.f32.partialorder %v500, 1.0
        %vm573 = vcmp.eq.f32.partialorder %v501, 1.0
        %vm574 = vcmp.eq.f32.partialorder %v502, 1.0
        %vm575 = vcmp.eq.f32.partialorder %v499, 2.0
        %vm576 = vcmp.eq.f32.partialorder %v500, 2.0
        %vm577 = vcmp.eq.f32.partialorder %v501, 2.0
        %vm578 = vcmp.eq.f32.partialorder %v502, 2.0
        %vm579 = vcmp.eq.f32.partialorder %v499, 3.0
        %vm580 = vcmp.eq.f32.partialorder %v500, 3.0
        %vm581 = vcmp.eq.f32.partialorder %v501, 3.0
        %vm582 = vcmp.eq.f32.partialorder %v502, 3.0
        %vm583 = vcmp.eq.f32.partialorder %v499, 4.0
        %vm584 = vcmp.eq.f32.partialorder %v500, 4.0
        %vm585 = vcmp.eq.f32.partialorder %v501, 4.0
        %vm586 = vcmp.eq.f32.partialorder %v502, 4.0
        %v587 = vsel %vm583, %v563, %v337
        %v588 = vsel %vm584, %v564, %v338
        %v589 = vsel %vm585, %v565, %v339
        %v590 = vsel %vm586, %v566, %v340
        %v591 = vsel %vm579, %v519, %v587
        %v592 = vsel %vm580, %v520, %v588
        %v593 = vsel %vm581, %v521, %v589
        %v594 = vsel %vm582, %v522, %v590
        %v595 = vsel %vm575, %v519, %v591
        %v596 = vsel %vm576, %v520, %v592
        %v597 = vsel %vm577, %v521, %v593
        %v598 = vsel %vm578, %v522, %v594
        %v599 = vsel %vm571, %v539, %v595
        %v600 = vsel %vm572, %v540, %v596
        %v601 = vsel %vm573, %v541, %v597
        %v602 = vsel %vm574, %v542, %v598
        %v603 = vsel %vm567, %v337, %v599
        %v604 = vsel %vm568, %v338, %v600
        %v605 = vsel %vm569, %v339, %v601
        %v606 = vsel %vm570, %v340, %v602
        %v607 = vsel %vm579, %v539, %v519
        %v608 = vsel %vm580, %v540, %v520
        %v609 = vsel %vm581, %v541, %v521
        %v610 = vsel %vm582, %v542, %v522
        %v611 = vsel %vm575, %v337, %v607
        %v612 = vsel %vm576, %v338, %v608
        %v613 = vsel %vm577, %v339, %v609
        %v614 = vsel %vm578, %v340, %v610
        %v615 = vsel %vm571, %v337, %v611
        %v616 = vsel %vm572, %v338, %v612
        %v617 = vsel %vm573, %v339, %v613
        %v618 = vsel %vm574, %v340, %v614
        %v619 = vsel %vm567, %v563, %v615
        %v620 = vsel %vm568, %v564, %v616
        %v621 = vsel %vm569, %v565, %v617
        %v622 = vsel %vm570, %v566, %v618
        %v623 = vsel %vm583, %v337, %v539
        %v624 = vsel %vm584, %v338, %v540
        %v625 = vsel %vm585, %v339, %v541
        %v626 = vsel %vm586, %v340, %v542
        %v627 = vsel %vm579, %v337, %v623
        %v628 = vsel %vm580, %v338, %v624
        %v629 = vsel %vm581, %v339, %v625
        %v630 = vsel %vm582, %v340, %v626
        %v631 = vsel %vm575, %v563, %v627
        %v632 = vsel %vm576, %v564, %v628
        %v633 = vsel %vm577, %v565, %v629
        %v634 = vsel %vm578, %v566, %v630
        %v635 = vsel %vm571, %v519, %v631
        %v636 = vsel %vm572, %v520, %v632
        %v637 = vsel %vm573, %v521, %v633
        %v638 = vsel %vm574, %v522, %v634
        %v639 = vsel %vm567, %v519, %v635
        %v640 = vsel %vm568, %v520, %v636
        %v641 = vsel %vm569, %v521, %v637
        %v642 = vsel %vm570, %v522, %v638
        %v643 = vmul.f32 %v603, 0.2989
        %v644 = vmul.f32 %v604, 0.2989
        %v645 = vmul.f32 %v605, 0.2989
        %v646 = vmul.f32 %v606, 0.2989
        %v647 = vmul.f32 %v619, 0.587
        %v648 = vmul.f32 %v620, 0.587
        %v649 = vmul.f32 %v621, 0.587
        %v650 = vmul.f32 %v622, 0.587
        %v651 = vadd.f32 %v643, %v647
        %v652 = vadd.f32 %v644, %v648
        %v653 = vadd.f32 %v645, %v649
        %v654 = vadd.f32 %v646, %v650
        %v655 = vmul.f32 %v639, 0.114
        %v656 = vmul.f32 %v640, 0.114
        %v657 = vmul.f32 %v641, 0.114
        %v658 = vmul.f32 %v642, 0.114
        %v659 = vadd.f32 %v651, %v655
        %v660 = vadd.f32 %v652, %v656
        %v661 = vadd.f32 %v653, %v657
        %v662 = vadd.f32 %v654, %v658
        %v663 = vstv %s222
        %v664 = vmul.f32 %v663, %v603
        %v665 = vmul.f32 %v663, %v604
        %v666 = vmul.f32 %v663, %v605
        %v667 = vmul.f32 %v663, %v606
        %s668 = ssub.f32 1.0, %s222
        %v669 = vstv %s668
        %v670 = vmul.f32 %v669, %v659
        %v671 = vmul.f32 %v669, %v660
        %v672 = vmul.f32 %v669, %v661
        %v673 = vmul.f32 %v669, %v662
        %v674 = vadd.f32 %v664, %v670
        %v675 = vadd.f32 %v665, %v671
        %v676 = vadd.f32 %v666, %v672
        %v677 = vadd.f32 %v667, %v673
        %v678 = vmax.f32 %v674, 0.0
        %v679 = vmax.f32 %v675, 0.0
        %v680 = vmax.f32 %v676, 0.0
        %v681 = vmax.f32 %v677, 0.0
        %v682 = vmin.f32 %v678, 1.0
        %v683 = vmin.f32 %v679, 1.0
        %v684 = vmin.f32 %v680, 1.0
        %v685 = vmin.f32 %v681, 1.0
        %v686 = vmul.f32 %v663, %v619
        %v687 = vmul.f32 %v663, %v620
        %v688 = vmul.f32 %v663, %v621
        %v689 = vmul.f32 %v663, %v622
        %v690 = vadd.f32 %v686, %v670
        %v691 = vadd.f32 %v687, %v671
        %v692 = vadd.f32 %v688, %v672
        %v693 = vadd.f32 %v689, %v673
        %v694 = vmax.f32 %v690, 0.0
        %v695 = vmax.f32 %v691, 0.0
        %v696 = vmax.f32 %v692, 0.0
        %v697 = vmax.f32 %v693, 0.0
        %v698 = vmin.f32 %v694, 1.0
        %v699 = vmin.f32 %v695, 1.0
        %v700 = vmin.f32 %v696, 1.0
        %v701 = vmin.f32 %v697, 1.0
        %v702 = vmul.f32 %v663, %v639
        %v703 = vmul.f32 %v663, %v640
        %v704 = vmul.f32 %v663, %v641
        %v705 = vmul.f32 %v663, %v642
        %v706 = vadd.f32 %v702, %v670
        %v707 = vadd.f32 %v703, %v671
        %v708 = vadd.f32 %v704, %v672
        %v709 = vadd.f32 %v705, %v673
        %v710 = vmax.f32 %v706, 0.0
        %v711 = vmax.f32 %v707, 0.0
        %v712 = vmax.f32 %v708, 0.0
        %v713 = vmax.f32 %v709, 0.0
        %v714 = vmin.f32 %v710, 1.0
        %v715 = vmin.f32 %v711, 1.0
        %v716 = vmin.f32 %v712, 1.0
        %v717 = vmin.f32 %v713, 1.0
        %v718 = vmul.f32 %v682, 0.2989
        %v719 = vmul.f32 %v683, 0.2989
        %v720 = vmul.f32 %v684, 0.2989
        %v721 = vmul.f32 %v685, 0.2989
        %v722 = vmul.f32 %v698, 0.587
        %v723 = vmul.f32 %v699, 0.587
        %v724 = vmul.f32 %v700, 0.587
        %v725 = vmul.f32 %v701, 0.587
        %v726 = vadd.f32 %v718, %v722
        %v727 = vadd.f32 %v719, %v723
        %v728 = vadd.f32 %v720, %v724
        %v729 = vadd.f32 %v721, %v725
        %v730 = vmul.f32 %v714, 0.114
        %v731 = vmul.f32 %v715, 0.114
        %v732 = vmul.f32 %v716, 0.114
        %v733 = vmul.f32 %v717, 0.114
        %v734 = vadd.f32 %v726, %v730
        %v735 = vadd.f32 %v727, %v731
        %v736 = vadd.f32 %v728, %v732
        %v737 = vadd.f32 %v729, %v733
        %v738 = vsel %vm327, %v734, 0.0
        %v739 = vsel %vm328, %v735, 0.0
        %v740 = vsel %vm329, %v736, 0.0
        %v741 = vsel %vm330, %v737, 0.0
        %v742 = vsel %vm248, %v738, 0.0
        %743 = vadd.xlane.f32.xlu0 %v742
        %v744 = vpop.xlane.xlu0 %743
        %v745 = vsel %vm248, %v739, 0.0
        %746 = vadd.xlane.f32.xlu0 %v745
        %v747 = vpop.xlane.xlu0 %746
        %v748 = vsel %vm248, %v740, 0.0
        %749 = vadd.xlane.f32.xlu0 %v748
        %v750 = vpop.xlane.xlu0 %749
        %v751 = vsel %vm248, %v741, 0.0
        %752 = vadd.xlane.f32.xlu0 %v751
        %v753 = vpop.xlane.xlu0 %752
        %v754 = vadd.f32 %v744, %v747
        %v755 = vadd.f32 %v754, %v750
        %v756 = vadd.f32 %v755, %v753
        %v757 = vrot.slane %v756, 4
        %v758 = vadd.f32 %v756, %v757
        %v759 = vrot.slane %v758, 2
        %v760 = vadd.f32 %v758, %v759
        %v761 = vrot.slane %v760, 1
        %v762 = vadd.f32 %v760, %v761
        %v763 = vstv %s332
        %v764 = vrcp.pop %v763
        %v765 = vmul.f32 %v762, %v764
        %v766 = vstv %s221
        %v767 = vmul.f32 %v766, %v682
        %v768 = vmul.f32 %v766, %v683
        %v769 = vmul.f32 %v766, %v684
        %v770 = vmul.f32 %v766, %v685
        %s771 = ssub.f32 1.0, %s221
        %v772 = vstv %s771
        %v773 = vmul.f32 %v772, %v765
        %v774 = vadd.f32 %v767, %v773
        %v775 = vadd.f32 %v768, %v773
        %v776 = vadd.f32 %v769, %v773
        %v777 = vadd.f32 %v770, %v773
        %v778 = vmax.f32 %v774, 0.0
        %v779 = vmax.f32 %v775, 0.0
        %v780 = vmax.f32 %v776, 0.0
        %v781 = vmax.f32 %v777, 0.0
        %v782 = vmin.f32 %v778, 1.0
        %v783 = vmin.f32 %v779, 1.0
        %v784 = vmin.f32 %v780, 1.0
        %v785 = vmin.f32 %v781, 1.0
        %v786 = vmul.f32 %v766, %v698
        %v787 = vmul.f32 %v766, %v699
        %v788 = vmul.f32 %v766, %v700
        %v789 = vmul.f32 %v766, %v701
        %v790 = vadd.f32 %v786, %v773
        %v791 = vadd.f32 %v787, %v773
        %v792 = vadd.f32 %v788, %v773
        %v793 = vadd.f32 %v789, %v773
        %v794 = vmax.f32 %v790, 0.0
        %v795 = vmax.f32 %v791, 0.0
        %v796 = vmax.f32 %v792, 0.0
        %v797 = vmax.f32 %v793, 0.0
        %v798 = vmin.f32 %v794, 1.0
        %v799 = vmin.f32 %v795, 1.0
        %v800 = vmin.f32 %v796, 1.0
        %v801 = vmin.f32 %v797, 1.0
        %v802 = vmul.f32 %v766, %v714
        %v803 = vmul.f32 %v766, %v715
        %v804 = vmul.f32 %v766, %v716
        %v805 = vmul.f32 %v766, %v717
        %v806 = vadd.f32 %v802, %v773
        %v807 = vadd.f32 %v803, %v773
        %v808 = vadd.f32 %v804, %v773
        %v809 = vadd.f32 %v805, %v773
        %v810 = vmax.f32 %v806, 0.0
        %v811 = vmax.f32 %v807, 0.0
        %v812 = vmax.f32 %v808, 0.0
        %v813 = vmax.f32 %v809, 0.0
        %v814 = vmin.f32 %v810, 1.0
        %v815 = vmin.f32 %v811, 1.0
        %v816 = vmin.f32 %v812, 1.0
        %v817 = vmin.f32 %v813, 1.0
        %v818 = vstv %s220
        %v819 = vmul.f32 %v818, %v782
        %v820 = vmul.f32 %v818, %v783
        %v821 = vmul.f32 %v818, %v784
        %v822 = vmul.f32 %v818, %v785
        %s823 = ssub.f32 1.0, %s220
        %s824 = smul.f32 %s823, 0.0
        %v825 = vstv %s824
        %v826 = vadd.f32 %v819, %v825
        %v827 = vadd.f32 %v820, %v825
        %v828 = vadd.f32 %v821, %v825
        %v829 = vadd.f32 %v822, %v825
        %v830 = vmax.f32 %v826, 0.0
        %v831 = vmax.f32 %v827, 0.0
        %v832 = vmax.f32 %v828, 0.0
        %v833 = vmax.f32 %v829, 0.0
        %v834 = vmin.f32 %v830, 1.0
        %v835 = vmin.f32 %v831, 1.0
        %v836 = vmin.f32 %v832, 1.0
        %v837 = vmin.f32 %v833, 1.0
        %v838 = vmul.f32 %v818, %v798
        %v839 = vmul.f32 %v818, %v799
        %v840 = vmul.f32 %v818, %v800
        %v841 = vmul.f32 %v818, %v801
        %v842 = vadd.f32 %v838, %v825
        %v843 = vadd.f32 %v839, %v825
        %v844 = vadd.f32 %v840, %v825
        %v845 = vadd.f32 %v841, %v825
        %v846 = vmax.f32 %v842, 0.0
        %v847 = vmax.f32 %v843, 0.0
        %v848 = vmax.f32 %v844, 0.0
        %v849 = vmax.f32 %v845, 0.0
        %v850 = vmin.f32 %v846, 1.0
        %v851 = vmin.f32 %v847, 1.0
        %v852 = vmin.f32 %v848, 1.0
        %v853 = vmin.f32 %v849, 1.0
        %v854 = vmul.f32 %v818, %v814
        %v855 = vmul.f32 %v818, %v815
        %v856 = vmul.f32 %v818, %v816
        %v857 = vmul.f32 %v818, %v817
        %v858 = vadd.f32 %v854, %v825
        %v859 = vadd.f32 %v855, %v825
        %v860 = vadd.f32 %v856, %v825
        %v861 = vadd.f32 %v857, %v825
        %v862 = vmax.f32 %v858, 0.0
        %v863 = vmax.f32 %v859, 0.0
        %v864 = vmax.f32 %v860, 0.0
        %v865 = vmax.f32 %v861, 0.0
        %v866 = vmin.f32 %v862, 1.0
        %v867 = vmin.f32 %v863, 1.0
        %v868 = vmin.f32 %v864, 1.0
        %v869 = vmin.f32 %v865, 1.0
        %s870 = ssub.s32 %s278, %s275
        %s871 = ssub.s32 %s217, %s215
        %v872 = vstv %s870
        %v873 = vadd.s32 %v302, %v872
        %vm874 = vcmp.eq.s32.totalorder %v297, %v873
        %vm875 = vcmp.eq.s32.totalorder %v298, %v873
        %vm876 = vcmp.eq.s32.totalorder %v299, %v873
        %vm877 = vcmp.eq.s32.totalorder %v300, %v873
        %v878 = vsel %vm874, 1.0, 0.0
        %v879 = vsel %vm875, 1.0, 0.0
        %v880 = vsel %vm876, 1.0, 0.0
        %v881 = vsel %vm877, 1.0, 0.0
        %v882 = vadd.s32 %v297, 32
        %v883 = vadd.s32 %v297, 40
        %v884 = vadd.s32 %v297, 48
        %v885 = vadd.s32 %v297, 56
        %v886 = vstv %s871
        %v887 = vadd.s32 %v297, %v886
        %v888 = vadd.s32 %v298, %v886
        %v889 = vadd.s32 %v299, %v886
        %v890 = vadd.s32 %v300, %v886
        %v891 = vadd.s32 %v882, %v886
        %v892 = vadd.s32 %v883, %v886
        %v893 = vadd.s32 %v884, %v886
        %v894 = vadd.s32 %v885, %v886
        %vm895 = vcmp.eq.s32.totalorder %v302, %v887
        %vm896 = vcmp.eq.s32.totalorder %v302, %v888
        %vm897 = vcmp.eq.s32.totalorder %v302, %v889
        %vm898 = vcmp.eq.s32.totalorder %v302, %v890
        %vm899 = vcmp.eq.s32.totalorder %v302, %v891
        %vm900 = vcmp.eq.s32.totalorder %v302, %v892
        %vm901 = vcmp.eq.s32.totalorder %v302, %v893
        %vm902 = vcmp.eq.s32.totalorder %v302, %v894
        %v903 = vsel %vm895, 1.0, 0.0
        %v904 = vsel %vm896, 1.0, 0.0
        %v905 = vsel %vm897, 1.0, 0.0
        %v906 = vsel %vm898, 1.0, 0.0
        %v907 = vsel %vm899, 1.0, 0.0
        %v908 = vsel %vm900, 1.0, 0.0
        %v909 = vsel %vm901, 1.0, 0.0
        %v910 = vsel %vm902, 1.0, 0.0
        %v911 = vstv %s278
        %vm912 = vcmp.ge.s32.totalorder %v297, %v911
        %vm913 = vcmp.ge.s32.totalorder %v298, %v911
        %vm914 = vcmp.ge.s32.totalorder %v299, %v911
        %vm915 = vcmp.ge.s32.totalorder %v300, %v911
        %s916 = sadd.s32 %s278, %s218
        %v917 = vstv %s916
        %vm918 = vcmp.lt.s32.totalorder %v297, %v917
        %vm919 = vcmp.lt.s32.totalorder %v298, %v917
        %vm920 = vcmp.lt.s32.totalorder %v299, %v917
        %vm921 = vcmp.lt.s32.totalorder %v300, %v917
        %vm922 = vmand %vm912, %vm918
        %vm923 = vmand %vm913, %vm919
        %vm924 = vmand %vm914, %vm920
        %vm925 = vmand %vm915, %vm921
        %v926 = vstv %s217
        %vm927 = vcmp.ge.s32.totalorder %v302, %v926
        %vm928 = vmand %vm922, %vm927
        %vm929 = vmand %vm923, %vm927
        %vm930 = vmand %vm924, %vm927
        %vm931 = vmand %vm925, %vm927
        %s932 = sadd.s32 %s217, %s219
        %v933 = vstv %s932
        %vm934 = vcmp.lt.s32.totalorder %v302, %v933
        %vm935 = vmand %vm928, %vm934
        %vm936 = vmand %vm929, %vm934
        %vm937 = vmand %vm930, %vm934
        %vm938 = vmand %vm931, %vm934
        %vm939 = vcmask 261120
        %v941 = vsel %vm939, %v878, 0
        %v944 = vsel %vm939, %v879, 0
        %v947 = vsel %vm939, %v880, 0
        %v950 = vsel %vm939, %v881, 0
        %952 = vmatprep.subr.mxu0 0.0
        %953 = vmatpush1.msra.mxu0 %v834
        %954 = vmatprep.subr.mxu0 0.0
        %955 = vmatpush1.msra.mxu0 %v835
        %956 = vmatprep.subr.mxu0 0.0
        %957 = vmatpush1.msra.mxu0 %v836
        %958 = vmatprep.subr.mxu0 0.0
        %959 = vmatpush1.msra.mxu0 %v837
        %960 = vmatprep.subr.mxu0 0.0
        %961 = vmatpush1.msra.mxu0 0.0
        %962 = vmatprep.subr.mxu0 0.0
        %963 = vmatpush1.msra.mxu0 0.0
        %964 = vmatprep.subr.mxu0 0.0
        %965 = vmatpush1.msra.mxu0 0.0
        %966 = vmatprep.subr.mxu0 0.0
        %967 = vmatpush1.msra.mxu0 0.0
        %968 = vmatprep.subr.mxu0 0.0
        %969 = vmatpush1.msra.mxu0 0.0
        %970 = vmatprep.subr.mxu0 0.0
        %971 = vmatpush1.msra.mxu0 0.0
        %972 = vmatprep.subr.mxu0 0.0
        %973 = vmatpush1.msra.mxu0 0.0
        %974 = vmatprep.subr.mxu0 0.0
        %975 = vmatpush1.msra.mxu0 0.0
        %976 = vmatprep.subr.mxu0 0.0
        %977 = vmatpush1.msra.mxu0 0.0
        %978 = vmatprep.subr.mxu0 0.0
        %979 = vmatpush1.msra.mxu0 0.0
        %980 = vmatprep.subr.mxu0 0.0
        %981 = vmatpush1.msra.mxu0 0.0
        %982 = vmatprep.subr.mxu0 0.0
        %983 = vmatpush1.msra.mxu0 0.0
        %984 = vmatprep.subr.mxu0 0.0
        %985 = vmatpush1.msra.mxu0 0.0
        %986 = vmatprep.subr.mxu0 0.0
        %987 = vmatpush1.msra.mxu0 0.0
        %988 = vmatprep.subr.mxu0 0.0
        %989 = vmatpush1.msra.mxu0 0.0
        %990 = vmatprep.subr.mxu0 0.0
        %991 = vmatpush1.msra.mxu0 0.0
        %992 = vmatprep.subr.mxu0 0.0
        %993 = vmatpush1.msra.mxu0 0.0
        %994 = vmatprep.subr.mxu0 0.0
        %995 = vmatpush1.msra.mxu0 0.0
        %996 = vmatprep.subr.mxu0 0.0
        %997 = vmatpush1.msra.mxu0 0.0
        %998 = vmatprep.subr.mxu0 0.0
        %999 = vmatpush1.msra.mxu0 0.0
        %1000 = vmatprep.subr.mxu0 0.0
        %1001 = vmatpush1.msra.mxu0 0.0
        %1002 = vmatprep.subr.mxu0 0.0
        %1003 = vmatpush1.msra.mxu0 0.0
        %1004 = vmatprep.subr.mxu0 0.0
        %1005 = vmatpush1.msra.mxu0 0.0
        %1006 = vmatprep.subr.mxu0 0.0
        %1007 = vmatpush1.msra.mxu0 0.0
        %1008 = vmatprep.subr.mxu0 0.0
        %1009 = vmatpush1.msra.mxu0 0.0
        %1010 = vmatprep.subr.mxu0 0.0
        %1011 = vmatpush1.msra.mxu0 0.0
        %1012 = vmatprep.subr.mxu0 0.0
        %1013 = vmatpush1.msra.mxu0 0.0
        %1014 = vmatprep.subr.mxu0 0.0
        %1015 = vmatpush1.msra.mxu0 0.0
        %1016 = vmatprep.mubr.f32.mxu0 0.0
        %1017 = vmatmul.mubr.f32.gmra.mrb[0].mxu0 %v941
        %v1018 = vpop.f32.mrb[0].mxu0
        %v1019 = vadd.f32 0.0, %v1018
        %v1020 = vpop.f32.mrb[0].mxu0
        %1021 = vmatprep.mubr.f32.mxu0 0.0
        %1022 = vmatmul.mubr.f32.gmra.mrb[0].mxu0 %v944
        %v1023 = vpop.f32.mrb[0].mxu0
        %v1024 = vadd.f32 0.0, %v1023
        %v1025 = vpop.f32.mrb[0].mxu0
        %1026 = vmatprep.mubr.f32.mxu0 0.0
        %1027 = vmatmul.mubr.f32.gmra.mrb[0].mxu0 %v947
        %v1028 = vpop.f32.mrb[0].mxu0
        %v1029 = vadd.f32 0.0, %v1028
        %v1030 = vpop.f32.mrb[0].mxu0
        %1031 = vmatprep.mubr.f32.mxu0 0.0
        %1032 = vmatmul.mubr.f32.gmra.mrb[0].mxu0 %v950
        %v1033 = vpop.f32.mrb[0].mxu0
        %v1034 = vadd.f32 0.0, %v1033
        %v1035 = vpop.f32.mrb[0].mxu0
        %1036 = vdwg.mxu0
        %v1038 = vsel %vm248, %v1019, 0
        %v1041 = vsel %vm248, %v1024, 0
        %v1044 = vsel %vm248, %v1029, 0
        %v1047 = vsel %vm248, %v1034, 0
        %1049 = vmatprep.subr.mxu0 0.0
        %1050 = vmatpush1.msra.mxu0 %v903
        %1051 = vmatprep.subr.mxu0 0.0
        %1052 = vmatpush1.msra.mxu0 %v904
        %1053 = vmatprep.subr.mxu0 0.0
        %1054 = vmatpush1.msra.mxu0 %v905
        %1055 = vmatprep.subr.mxu0 0.0
        %1056 = vmatpush1.msra.mxu0 %v906
        %1057 = vmatprep.subr.mxu0 0.0
        %1058 = vmatpush1.msra.mxu0 %v907
        %1059 = vmatprep.subr.mxu0 0.0
        %1060 = vmatpush1.msra.mxu0 %v908
        %1061 = vmatprep.subr.mxu0 0.0
        %1062 = vmatpush1.msra.mxu0 %v909
        %1063 = vmatprep.subr.mxu0 0.0
        %1064 = vmatpush1.msra.mxu0 %v910
        %1065 = vmatprep.subr.mxu0 0.0
        %1066 = vmatpush1.msra.mxu0 0.0
        %1067 = vmatprep.subr.mxu0 0.0
        %1068 = vmatpush1.msra.mxu0 0.0
        %1069 = vmatprep.subr.mxu0 0.0
        %1070 = vmatpush1.msra.mxu0 0.0
        %1071 = vmatprep.subr.mxu0 0.0
        %1072 = vmatpush1.msra.mxu0 0.0
        %1073 = vmatprep.subr.mxu0 0.0
        %1074 = vmatpush1.msra.mxu0 0.0
        %1075 = vmatprep.subr.mxu0 0.0
        %1076 = vmatpush1.msra.mxu0 0.0
        %1077 = vmatprep.subr.mxu0 0.0
        %1078 = vmatpush1.msra.mxu0 0.0
        %1079 = vmatprep.subr.mxu0 0.0
        %1080 = vmatpush1.msra.mxu0 0.0
        %1081 = vmatprep.subr.mxu0 0.0
        %1082 = vmatpush1.msra.mxu0 0.0
        %1083 = vmatprep.subr.mxu0 0.0
        %1084 = vmatpush1.msra.mxu0 0.0
        %1085 = vmatprep.subr.mxu0 0.0
        %1086 = vmatpush1.msra.mxu0 0.0
        %1087 = vmatprep.subr.mxu0 0.0
        %1088 = vmatpush1.msra.mxu0 0.0
        %1089 = vmatprep.subr.mxu0 0.0
        %1090 = vmatpush1.msra.mxu0 0.0
        %1091 = vmatprep.subr.mxu0 0.0
        %1092 = vmatpush1.msra.mxu0 0.0
        %1093 = vmatprep.subr.mxu0 0.0
        %1094 = vmatpush1.msra.mxu0 0.0
        %1095 = vmatprep.subr.mxu0 0.0
        %1096 = vmatpush1.msra.mxu0 0.0
        %1097 = vmatprep.subr.mxu0 0.0
        %1098 = vmatpush1.msra.mxu0 0.0
        %1099 = vmatprep.subr.mxu0 0.0
        %1100 = vmatpush1.msra.mxu0 0.0
        %1101 = vmatprep.subr.mxu0 0.0
        %1102 = vmatpush1.msra.mxu0 0.0
        %1103 = vmatprep.subr.mxu0 0.0
        %1104 = vmatpush1.msra.mxu0 0.0
        %1105 = vmatprep.subr.mxu0 0.0
        %1106 = vmatpush1.msra.mxu0 0.0
        %1107 = vmatprep.subr.mxu0 0.0
        %1108 = vmatpush1.msra.mxu0 0.0
        %1109 = vmatprep.subr.mxu0 0.0
        %1110 = vmatpush1.msra.mxu0 0.0
        %1111 = vmatprep.subr.mxu0 0.0
        %1112 = vmatpush1.msra.mxu0 0.0
        %1113 = vmatprep.mubr.f32.mxu0 0.0
        %1114 = vmatmul.mubr.f32.gmra.mrb[0].mxu0 %v1038
        %v1115 = vpop.f32.mrb[0].mxu0
        %v1116 = vadd.f32 0.0, %v1115
        %v1117 = vpop.f32.mrb[0].mxu0
        %1118 = vmatprep.mubr.f32.mxu0 0.0
        %1119 = vmatmul.mubr.f32.gmra.mrb[0].mxu0 %v1041
        %v1120 = vpop.f32.mrb[0].mxu0
        %v1121 = vadd.f32 0.0, %v1120
        %v1122 = vpop.f32.mrb[0].mxu0
        %1123 = vmatprep.mubr.f32.mxu0 0.0
        %1124 = vmatmul.mubr.f32.gmra.mrb[0].mxu0 %v1044
        %v1125 = vpop.f32.mrb[0].mxu0
        %v1126 = vadd.f32 0.0, %v1125
        %v1127 = vpop.f32.mrb[0].mxu0
        %1128 = vmatprep.mubr.f32.mxu0 0.0
        %1129 = vmatmul.mubr.f32.gmra.mrb[0].mxu0 %v1047
        %v1130 = vpop.f32.mrb[0].mxu0
        %v1131 = vadd.f32 0.0, %v1130
        %v1132 = vpop.f32.mrb[0].mxu0
        %1133 = vdwg.mxu0
        %s1134 = scalar_lea.vmem %s190, %s277 [#allocation8]
        %v1135 = vld [vmem:[%s1134] sm:$0xff]
        %v1136 = vld [vmem:[%s1134 + $0x8] sm:$0xff]
        %v1137 = vld [vmem:[%s1134 + $0x10] sm:$0xff]
        %v1138 = vld [vmem:[%s1134 + $0x18] sm:$0xff]
        %v1139 = vsel %vm935, %v1116, %v1135
        %v1140 = vsel %vm936, %v1121, %v1136
        %v1141 = vsel %vm937, %v1126, %v1137
        %v1142 = vsel %vm938, %v1131, %v1138
        %s1143 = scalar_lea.vmem %s213, %s277 [#allocation9]
        %1144 = vst.msk [vmem:[%s1143] sm:$0xff] %vm248, %v1139
        %1145 = vst.msk [vmem:[%s1143 + $0x8] sm:$0xff] %vm248, %v1140
        %1146 = vst.msk [vmem:[%s1143 + $0x10] sm:$0xff] %vm248, %v1141
        %1147 = vst.msk [vmem:[%s1143 + $0x18] sm:$0xff] %vm248, %v1142
        %1148 = vmatprep.subr.mxu0 0.0
        %1149 = vmatpush1.msra.mxu0 %v850
        %1150 = vmatprep.subr.mxu0 0.0
        %1151 = vmatpush1.msra.mxu0 %v851
        %1152 = vmatprep.subr.mxu0 0.0
        %1153 = vmatpush1.msra.mxu0 %v852
        %1154 = vmatprep.subr.mxu0 0.0
        %1155 = vmatpush1.msra.mxu0 %v853
        %1156 = vmatprep.subr.mxu0 0.0
        %1157 = vmatpush1.msra.mxu0 0.0
        %1158 = vmatprep.subr.mxu0 0.0
        %1159 = vmatpush1.msra.mxu0 0.0
        %1160 = vmatprep.subr.mxu0 0.0
        %1161 = vmatpush1.msra.mxu0 0.0
        %1162 = vmatprep.subr.mxu0 0.0
        %1163 = vmatpush1.msra.mxu0 0.0
        %1164 = vmatprep.subr.mxu0 0.0
        %1165 = vmatpush1.msra.mxu0 0.0
        %1166 = vmatprep.subr.mxu0 0.0
        %1167 = vmatpush1.msra.mxu0 0.0
        %1168 = vmatprep.subr.mxu0 0.0
        %1169 = vmatpush1.msra.mxu0 0.0
        %1170 = vmatprep.subr.mxu0 0.0
        %1171 = vmatpush1.msra.mxu0 0.0
        %1172 = vmatprep.subr.mxu0 0.0
        %1173 = vmatpush1.msra.mxu0 0.0
        %1174 = vmatprep.subr.mxu0 0.0
        %1175 = vmatpush1.msra.mxu0 0.0
        %1176 = vmatprep.subr.mxu0 0.0
        %1177 = vmatpush1.msra.mxu0 0.0
        %1178 = vmatprep.subr.mxu0 0.0
        %1179 = vmatpush1.msra.mxu0 0.0
        %1180 = vmatprep.subr.mxu0 0.0
        %1181 = vmatpush1.msra.mxu0 0.0
        %1182 = vmatprep.subr.mxu0 0.0
        %1183 = vmatpush1.msra.mxu0 0.0
        %1184 = vmatprep.subr.mxu0 0.0
        %1185 = vmatpush1.msra.mxu0 0.0
        %1186 = vmatprep.subr.mxu0 0.0
        %1187 = vmatpush1.msra.mxu0 0.0
        %1188 = vmatprep.subr.mxu0 0.0
        %1189 = vmatpush1.msra.mxu0 0.0
        %1190 = vmatprep.subr.mxu0 0.0
        %1191 = vmatpush1.msra.mxu0 0.0
        %1192 = vmatprep.subr.mxu0 0.0
        %1193 = vmatpush1.msra.mxu0 0.0
        %1194 = vmatprep.subr.mxu0 0.0
        %1195 = vmatpush1.msra.mxu0 0.0
        %1196 = vmatprep.subr.mxu0 0.0
        %1197 = vmatpush1.msra.mxu0 0.0
        %1198 = vmatprep.subr.mxu0 0.0
        %1199 = vmatpush1.msra.mxu0 0.0
        %1200 = vmatprep.subr.mxu0 0.0
        %1201 = vmatpush1.msra.mxu0 0.0
        %1202 = vmatprep.subr.mxu0 0.0
        %1203 = vmatpush1.msra.mxu0 0.0
        %1204 = vmatprep.subr.mxu0 0.0
        %1205 = vmatpush1.msra.mxu0 0.0
        %1206 = vmatprep.subr.mxu0 0.0
        %1207 = vmatpush1.msra.mxu0 0.0
        %1208 = vmatprep.subr.mxu0 0.0
        %1209 = vmatpush1.msra.mxu0 0.0
        %1210 = vmatprep.subr.mxu0 0.0
        %1211 = vmatpush1.msra.mxu0 0.0
        %1212 = vmatprep.mubr.f32.mxu0 0.0
        %1213 = vmatmul.mubr.f32.gmra.mrb[0].mxu0 %v941
        %v1214 = vpop.f32.mrb[0].mxu0
        %v1215 = vadd.f32 0.0, %v1214
        %v1216 = vpop.f32.mrb[0].mxu0
        %1217 = vmatprep.mubr.f32.mxu0 0.0
        %1218 = vmatmul.mubr.f32.gmra.mrb[0].mxu0 %v944
        %v1219 = vpop.f32.mrb[0].mxu0
        %v1220 = vadd.f32 0.0, %v1219
        %v1221 = vpop.f32.mrb[0].mxu0
        %1222 = vmatprep.mubr.f32.mxu0 0.0
        %1223 = vmatmul.mubr.f32.gmra.mrb[0].mxu0 %v947
        %v1224 = vpop.f32.mrb[0].mxu0
        %v1225 = vadd.f32 0.0, %v1224
        %v1226 = vpop.f32.mrb[0].mxu0
        %1227 = vmatprep.mubr.f32.mxu0 0.0
        %1228 = vmatmul.mubr.f32.gmra.mrb[0].mxu0 %v950
        %v1229 = vpop.f32.mrb[0].mxu0
        %v1230 = vadd.f32 0.0, %v1229
        %v1231 = vpop.f32.mrb[0].mxu0
        %1232 = vdwg.mxu0
        %v1234 = vsel %vm248, %v1215, 0
        %v1237 = vsel %vm248, %v1220, 0
        %v1240 = vsel %vm248, %v1225, 0
        %v1243 = vsel %vm248, %v1230, 0
        %1245 = vmatprep.subr.mxu0 0.0
        %1246 = vmatpush1.msra.mxu0 %v903
        %1247 = vmatprep.subr.mxu0 0.0
        %1248 = vmatpush1.msra.mxu0 %v904
        %1249 = vmatprep.subr.mxu0 0.0
        %1250 = vmatpush1.msra.mxu0 %v905
        %1251 = vmatprep.subr.mxu0 0.0
        %1252 = vmatpush1.msra.mxu0 %v906
        %1253 = vmatprep.subr.mxu0 0.0
        %1254 = vmatpush1.msra.mxu0 %v907
        %1255 = vmatprep.subr.mxu0 0.0
        %1256 = vmatpush1.msra.mxu0 %v908
        %1257 = vmatprep.subr.mxu0 0.0
        %1258 = vmatpush1.msra.mxu0 %v909
        %1259 = vmatprep.subr.mxu0 0.0
        %1260 = vmatpush1.msra.mxu0 %v910
        %1261 = vmatprep.subr.mxu0 0.0
        %1262 = vmatpush1.msra.mxu0 0.0
        %1263 = vmatprep.subr.mxu0 0.0
        %1264 = vmatpush1.msra.mxu0 0.0
        %1265 = vmatprep.subr.mxu0 0.0
        %1266 = vmatpush1.msra.mxu0 0.0
        %1267 = vmatprep.subr.mxu0 0.0
        %1268 = vmatpush1.msra.mxu0 0.0
        %1269 = vmatprep.subr.mxu0 0.0
        %1270 = vmatpush1.msra.mxu0 0.0
        %1271 = vmatprep.subr.mxu0 0.0
        %1272 = vmatpush1.msra.mxu0 0.0
        %1273 = vmatprep.subr.mxu0 0.0
        %1274 = vmatpush1.msra.mxu0 0.0
        %1275 = vmatprep.subr.mxu0 0.0
        %1276 = vmatpush1.msra.mxu0 0.0
        %1277 = vmatprep.subr.mxu0 0.0
        %1278 = vmatpush1.msra.mxu0 0.0
        %1279 = vmatprep.subr.mxu0 0.0
        %1280 = vmatpush1.msra.mxu0 0.0
        %1281 = vmatprep.subr.mxu0 0.0
        %1282 = vmatpush1.msra.mxu0 0.0
        %1283 = vmatprep.subr.mxu0 0.0
        %1284 = vmatpush1.msra.mxu0 0.0
        %1285 = vmatprep.subr.mxu0 0.0
        %1286 = vmatpush1.msra.mxu0 0.0
        %1287 = vmatprep.subr.mxu0 0.0
        %1288 = vmatpush1.msra.mxu0 0.0
        %1289 = vmatprep.subr.mxu0 0.0
        %1290 = vmatpush1.msra.mxu0 0.0
        %1291 = vmatprep.subr.mxu0 0.0
        %1292 = vmatpush1.msra.mxu0 0.0
        %1293 = vmatprep.subr.mxu0 0.0
        %1294 = vmatpush1.msra.mxu0 0.0
        %1295 = vmatprep.subr.mxu0 0.0
        %1296 = vmatpush1.msra.mxu0 0.0
        %1297 = vmatprep.subr.mxu0 0.0
        %1298 = vmatpush1.msra.mxu0 0.0
        %1299 = vmatprep.subr.mxu0 0.0
        %1300 = vmatpush1.msra.mxu0 0.0
        %1301 = vmatprep.subr.mxu0 0.0
        %1302 = vmatpush1.msra.mxu0 0.0
        %1303 = vmatprep.subr.mxu0 0.0
        %1304 = vmatpush1.msra.mxu0 0.0
        %1305 = vmatprep.subr.mxu0 0.0
        %1306 = vmatpush1.msra.mxu0 0.0
        %1307 = vmatprep.subr.mxu0 0.0
        %1308 = vmatpush1.msra.mxu0 0.0
        %1309 = vmatprep.mubr.f32.mxu0 0.0
        %1310 = vmatmul.mubr.f32.gmra.mrb[0].mxu0 %v1234
        %v1311 = vpop.f32.mrb[0].mxu0
        %v1312 = vadd.f32 0.0, %v1311
        %v1313 = vpop.f32.mrb[0].mxu0
        %1314 = vmatprep.mubr.f32.mxu0 0.0
        %1315 = vmatmul.mubr.f32.gmra.mrb[0].mxu0 %v1237
        %v1316 = vpop.f32.mrb[0].mxu0
        %v1317 = vadd.f32 0.0, %v1316
        %v1318 = vpop.f32.mrb[0].mxu0
        %1319 = vmatprep.mubr.f32.mxu0 0.0
        %1320 = vmatmul.mubr.f32.gmra.mrb[0].mxu0 %v1240
        %v1321 = vpop.f32.mrb[0].mxu0
        %v1322 = vadd.f32 0.0, %v1321
        %v1323 = vpop.f32.mrb[0].mxu0
        %1324 = vmatprep.mubr.f32.mxu0 0.0
        %1325 = vmatmul.mubr.f32.gmra.mrb[0].mxu0 %v1243
        %v1326 = vpop.f32.mrb[0].mxu0
        %v1327 = vadd.f32 0.0, %v1326
        %v1328 = vpop.f32.mrb[0].mxu0
        %1329 = vdwg.mxu0
        %s1330 = sadd.s32 %s277, 64
        %s1331 = scalar_lea.vmem %s190, %s1330 [#allocation8]
        %v1332 = vld [vmem:[%s1331] sm:$0xff]
        %v1333 = vld [vmem:[%s1331 + $0x8] sm:$0xff]
        %v1334 = vld [vmem:[%s1331 + $0x10] sm:$0xff]
        %v1335 = vld [vmem:[%s1331 + $0x18] sm:$0xff]
        %v1336 = vsel %vm935, %v1312, %v1332
        %v1337 = vsel %vm936, %v1317, %v1333
        %v1338 = vsel %vm937, %v1322, %v1334
        %v1339 = vsel %vm938, %v1327, %v1335
        %s1340 = scalar_lea.vmem %s213, %s1330 [#allocation9]
        %1341 = vst.msk [vmem:[%s1340] sm:$0xff] %vm248, %v1336
        %1342 = vst.msk [vmem:[%s1340 + $0x8] sm:$0xff] %vm248, %v1337
        %1343 = vst.msk [vmem:[%s1340 + $0x10] sm:$0xff] %vm248, %v1338
        %1344 = vst.msk [vmem:[%s1340 + $0x18] sm:$0xff] %vm248, %v1339
        %1345 = vmatprep.subr.mxu0 0.0
        %1346 = vmatpush1.msra.mxu0 %v866
        %1347 = vmatprep.subr.mxu0 0.0
        %1348 = vmatpush1.msra.mxu0 %v867
        %1349 = vmatprep.subr.mxu0 0.0
        %1350 = vmatpush1.msra.mxu0 %v868
        %1351 = vmatprep.subr.mxu0 0.0
        %1352 = vmatpush1.msra.mxu0 %v869
        %1353 = vmatprep.subr.mxu0 0.0
        %1354 = vmatpush1.msra.mxu0 0.0
        %1355 = vmatprep.subr.mxu0 0.0
        %1356 = vmatpush1.msra.mxu0 0.0
        %1357 = vmatprep.subr.mxu0 0.0
        %1358 = vmatpush1.msra.mxu0 0.0
        %1359 = vmatprep.subr.mxu0 0.0
        %1360 = vmatpush1.msra.mxu0 0.0
        %1361 = vmatprep.subr.mxu0 0.0
        %1362 = vmatpush1.msra.mxu0 0.0
        %1363 = vmatprep.subr.mxu0 0.0
        %1364 = vmatpush1.msra.mxu0 0.0
        %1365 = vmatprep.subr.mxu0 0.0
        %1366 = vmatpush1.msra.mxu0 0.0
        %1367 = vmatprep.subr.mxu0 0.0
        %1368 = vmatpush1.msra.mxu0 0.0
        %1369 = vmatprep.subr.mxu0 0.0
        %1370 = vmatpush1.msra.mxu0 0.0
        %1371 = vmatprep.subr.mxu0 0.0
        %1372 = vmatpush1.msra.mxu0 0.0
        %1373 = vmatprep.subr.mxu0 0.0
        %1374 = vmatpush1.msra.mxu0 0.0
        %1375 = vmatprep.subr.mxu0 0.0
        %1376 = vmatpush1.msra.mxu0 0.0
        %1377 = vmatprep.subr.mxu0 0.0
        %1378 = vmatpush1.msra.mxu0 0.0
        %1379 = vmatprep.subr.mxu0 0.0
        %1380 = vmatpush1.msra.mxu0 0.0
        %1381 = vmatprep.subr.mxu0 0.0
        %1382 = vmatpush1.msra.mxu0 0.0
        %1383 = vmatprep.subr.mxu0 0.0
        %1384 = vmatpush1.msra.mxu0 0.0
        %1385 = vmatprep.subr.mxu0 0.0
        %1386 = vmatpush1.msra.mxu0 0.0
        %1387 = vmatprep.subr.mxu0 0.0
        %1388 = vmatpush1.msra.mxu0 0.0
        %1389 = vmatprep.subr.mxu0 0.0
        %1390 = vmatpush1.msra.mxu0 0.0
        %1391 = vmatprep.subr.mxu0 0.0
        %1392 = vmatpush1.msra.mxu0 0.0
        %1393 = vmatprep.subr.mxu0 0.0
        %1394 = vmatpush1.msra.mxu0 0.0
        %1395 = vmatprep.subr.mxu0 0.0
        %1396 = vmatpush1.msra.mxu0 0.0
        %1397 = vmatprep.subr.mxu0 0.0
        %1398 = vmatpush1.msra.mxu0 0.0
        %1399 = vmatprep.subr.mxu0 0.0
        %1400 = vmatpush1.msra.mxu0 0.0
        %1401 = vmatprep.subr.mxu0 0.0
        %1402 = vmatpush1.msra.mxu0 0.0
        %1403 = vmatprep.subr.mxu0 0.0
        %1404 = vmatpush1.msra.mxu0 0.0
        %1405 = vmatprep.subr.mxu0 0.0
        %1406 = vmatpush1.msra.mxu0 0.0
        %1407 = vmatprep.subr.mxu0 0.0
        %1408 = vmatpush1.msra.mxu0 0.0
        %1409 = vmatprep.mubr.f32.mxu0 0.0
        %1410 = vmatmul.mubr.f32.gmra.mrb[0].mxu0 %v941
        %v1411 = vpop.f32.mrb[0].mxu0
        %v1412 = vadd.f32 0.0, %v1411
        %v1413 = vpop.f32.mrb[0].mxu0
        %1414 = vmatprep.mubr.f32.mxu0 0.0
        %1415 = vmatmul.mubr.f32.gmra.mrb[0].mxu0 %v944
        %v1416 = vpop.f32.mrb[0].mxu0
        %v1417 = vadd.f32 0.0, %v1416
        %v1418 = vpop.f32.mrb[0].mxu0
        %1419 = vmatprep.mubr.f32.mxu0 0.0
        %1420 = vmatmul.mubr.f32.gmra.mrb[0].mxu0 %v947
        %v1421 = vpop.f32.mrb[0].mxu0
        %v1422 = vadd.f32 0.0, %v1421
        %v1423 = vpop.f32.mrb[0].mxu0
        %1424 = vmatprep.mubr.f32.mxu0 0.0
        %1425 = vmatmul.mubr.f32.gmra.mrb[0].mxu0 %v950
        %v1426 = vpop.f32.mrb[0].mxu0
        %v1427 = vadd.f32 0.0, %v1426
        %v1428 = vpop.f32.mrb[0].mxu0
        %1429 = vdwg.mxu0
        %v1431 = vsel %vm248, %v1412, 0
        %v1434 = vsel %vm248, %v1417, 0
        %v1437 = vsel %vm248, %v1422, 0
        %v1440 = vsel %vm248, %v1427, 0
        %1442 = vmatprep.subr.mxu0 0.0
        %1443 = vmatpush1.msra.mxu0 %v903
        %1444 = vmatprep.subr.mxu0 0.0
        %1445 = vmatpush1.msra.mxu0 %v904
        %1446 = vmatprep.subr.mxu0 0.0
        %1447 = vmatpush1.msra.mxu0 %v905
        %1448 = vmatprep.subr.mxu0 0.0
        %1449 = vmatpush1.msra.mxu0 %v906
        %1450 = vmatprep.subr.mxu0 0.0
        %1451 = vmatpush1.msra.mxu0 %v907
        %1452 = vmatprep.subr.mxu0 0.0
        %1453 = vmatpush1.msra.mxu0 %v908
        %1454 = vmatprep.subr.mxu0 0.0
        %1455 = vmatpush1.msra.mxu0 %v909
        %1456 = vmatprep.subr.mxu0 0.0
        %1457 = vmatpush1.msra.mxu0 %v910
        %1458 = vmatprep.subr.mxu0 0.0
        %1459 = vmatpush1.msra.mxu0 0.0
        %1460 = vmatprep.subr.mxu0 0.0
        %1461 = vmatpush1.msra.mxu0 0.0
        %1462 = vmatprep.subr.mxu0 0.0
        %1463 = vmatpush1.msra.mxu0 0.0
        %1464 = vmatprep.subr.mxu0 0.0
        %1465 = vmatpush1.msra.mxu0 0.0
        %1466 = vmatprep.subr.mxu0 0.0
        %1467 = vmatpush1.msra.mxu0 0.0
        %1468 = vmatprep.subr.mxu0 0.0
        %1469 = vmatpush1.msra.mxu0 0.0
        %1470 = vmatprep.subr.mxu0 0.0
        %1471 = vmatpush1.msra.mxu0 0.0
        %1472 = vmatprep.subr.mxu0 0.0
        %1473 = vmatpush1.msra.mxu0 0.0
        %1474 = vmatprep.subr.mxu0 0.0
        %1475 = vmatpush1.msra.mxu0 0.0
        %1476 = vmatprep.subr.mxu0 0.0
        %1477 = vmatpush1.msra.mxu0 0.0
        %1478 = vmatprep.subr.mxu0 0.0
        %1479 = vmatpush1.msra.mxu0 0.0
        %1480 = vmatprep.subr.mxu0 0.0
        %1481 = vmatpush1.msra.mxu0 0.0
        %1482 = vmatprep.subr.mxu0 0.0
        %1483 = vmatpush1.msra.mxu0 0.0
        %1484 = vmatprep.subr.mxu0 0.0
        %1485 = vmatpush1.msra.mxu0 0.0
        %1486 = vmatprep.subr.mxu0 0.0
        %1487 = vmatpush1.msra.mxu0 0.0
        %1488 = vmatprep.subr.mxu0 0.0
        %1489 = vmatpush1.msra.mxu0 0.0
        %1490 = vmatprep.subr.mxu0 0.0
        %1491 = vmatpush1.msra.mxu0 0.0
        %1492 = vmatprep.subr.mxu0 0.0
        %1493 = vmatpush1.msra.mxu0 0.0
        %1494 = vmatprep.subr.mxu0 0.0
        %1495 = vmatpush1.msra.mxu0 0.0
        %1496 = vmatprep.subr.mxu0 0.0
        %1497 = vmatpush1.msra.mxu0 0.0
        %1498 = vmatprep.subr.mxu0 0.0
        %1499 = vmatpush1.msra.mxu0 0.0
        %1500 = vmatprep.subr.mxu0 0.0
        %1501 = vmatpush1.msra.mxu0 0.0
        %1502 = vmatprep.subr.mxu0 0.0
        %1503 = vmatpush1.msra.mxu0 0.0
        %1504 = vmatprep.subr.mxu0 0.0
        %1505 = vmatpush1.msra.mxu0 0.0
        %1506 = vmatprep.mubr.f32.mxu0 0.0
        %1507 = vmatmul.mubr.f32.gmra.mrb[0].mxu0 %v1431
        %v1508 = vpop.f32.mrb[0].mxu0
        %v1509 = vadd.f32 0.0, %v1508
        %v1510 = vpop.f32.mrb[0].mxu0
        %1511 = vmatprep.mubr.f32.mxu0 0.0
        %1512 = vmatmul.mubr.f32.gmra.mrb[0].mxu0 %v1434
        %v1513 = vpop.f32.mrb[0].mxu0
        %v1514 = vadd.f32 0.0, %v1513
        %v1515 = vpop.f32.mrb[0].mxu0
        %1516 = vmatprep.mubr.f32.mxu0 0.0
        %1517 = vmatmul.mubr.f32.gmra.mrb[0].mxu0 %v1437
        %v1518 = vpop.f32.mrb[0].mxu0
        %v1519 = vadd.f32 0.0, %v1518
        %v1520 = vpop.f32.mrb[0].mxu0
        %1521 = vmatprep.mubr.f32.mxu0 0.0
        %1522 = vmatmul.mubr.f32.gmra.mrb[0].mxu0 %v1440
        %v1523 = vpop.f32.mrb[0].mxu0
        %v1524 = vadd.f32 0.0, %v1523
        %v1525 = vpop.f32.mrb[0].mxu0
        %1526 = vdwg.mxu0
        %s1527 = sadd.s32 %s277, 128
        %s1528 = scalar_lea.vmem %s190, %s1527 [#allocation8]
        %v1529 = vld [vmem:[%s1528] sm:$0xff]
        %v1530 = vld [vmem:[%s1528 + $0x8] sm:$0xff]
        %v1531 = vld [vmem:[%s1528 + $0x10] sm:$0xff]
        %v1532 = vld [vmem:[%s1528 + $0x18] sm:$0xff]
        %v1533 = vsel %vm935, %v1509, %v1529
        %v1534 = vsel %vm936, %v1514, %v1530
        %v1535 = vsel %vm937, %v1519, %v1531
        %v1536 = vsel %vm938, %v1524, %v1532
        %s1537 = scalar_lea.vmem %s213, %s1527 [#allocation9]
        %1538 = vst.msk [vmem:[%s1537] sm:$0xff] %vm248, %v1533
        %1539 = vst.msk [vmem:[%s1537 + $0x8] sm:$0xff] %vm248, %v1534
        %1540 = vst.msk [vmem:[%s1537 + $0x10] sm:$0xff] %vm248, %v1535
        %1541 = vst.msk [vmem:[%s1537 + $0x18] sm:$0xff] %vm248, %v1536
        %s1542 = sand.u32 %s98, 1
        %s1543 = scalar_lea.sflag [#allocation4], %s1542
        %s1544 = sand.u32 %s98, 1
        %s1545 = smul.addr %s1544, 192
        %s1546 = scalar_lea.vmem [#allocation9], %s1545
        // Predicated region
        $region45: #{tpu_custom_call.1} parent=31 // pred_check
          %p1547 = pneg %p108
        $region46: #{tpu_custom_call.1} parent=31 // pred_check_branch
          %1549 = sbr.rel (%p1547) target = $region48
        $region47: #{tpu_custom_call.1} parent=31 // pred_region
          %s1551 = ssub.s32 3072, 3072
          %1552 = vsyncadd %s1543, %s1551
          %s1553 = smul.addr %s22, 24
          %s1554 = smul.addr %s1553, 128
          %s1555 = scalar_lea.hbm %s3, %s1554
          %s1556 = sshll.u32 %s1546, 4
          %s1557 = int_to_ptr.vmem [resolvable:$true] %s1556
          %1562 = dma.vmem_to_hbm [thread:$0]  %s1557, 3072, %s1555, %s1543, 128, 128, 8
        $region48: #{tpu_custom_call.1} parent=31 // pred_fallthru
          _
      $region32: #{tpu_custom_call.1} parent=5 // pred_fallthru
        _
      %p1563 = scmp.le.s32.totalorder 2, %s17
      // Predicated region
      $region49: #{tpu_custom_call.1} parent=5 // pred_check
        %p1564 = pneg %p1563
      $region50: #{tpu_custom_call.1} parent=5 // pred_check_branch
        %1566 = sbr.rel (%p1564) target = $region52
      $region51: #{tpu_custom_call.1} parent=5 // pred_region
        %s1567 = ssub.s32 %s17, 2
        // Predicated region
        $region53: #{tpu_custom_call.1} parent=51 // pred_check
          %p1568 = pneg %p114
        $region54: #{tpu_custom_call.1} parent=51 // pred_check_branch
          %1570 = sbr.rel (%p1568) target = $region56
        $region55: #{tpu_custom_call.1} parent=51 // pred_region
          %s1571 = sand.u32 %s99, 1
          %s1572 = scalar_lea.sflag [#allocation4], %s1571
          %s1573 = sand.u32 %s99, 1
          %s1574 = smul.addr %s1573, 192
          %s1575 = scalar_lea.vmem [#allocation9], %s1574
          %1576 = dma.done %s1572, 3072
        $region56: #{tpu_custom_call.1} parent=51 // pred_fallthru
          _
      $region52: #{tpu_custom_call.1} parent=5 // pred_fallthru
        _
    $region6: #{tpu_custom_call.1} parent=1 // loop_footer
      %s21 = sadd.s32 1, %s17
    $region7: #{tpu_custom_call.1} parent=1 // loop_footer_branch
      %16 = sbr.rel target = $region3
    $region8: #{tpu_custom_call.1} parent=1 // loop_exit
      _
    %1577 = vsyncpa [#allocation3], 1
    %s1578 = scalar_lea.sflag [#allocation3], 1
    %1579 = vsyncpa %s1578, 1
    %1580 = vsyncpa [#allocation4], 1
    %s1581 = scalar_lea.sflag [#allocation4], 1
    %1582 = vsyncpa %s1581, 1
    %1583 = vsyncpa [#allocation5], 1
    %s1584 = scalar_lea.sflag [#allocation5], 1
    %1585 = vsyncpa %s1584, 1
    %1586 = vsyncpa [#allocation6], 1
    %s1587 = scalar_lea.sflag [#allocation6], 1
    %1588 = vsyncpa %s1587, 1

</llo_original>
